<compile_context>
chip_gen: v7x
topology: tpu7x:2x2x1
jax: 0.10.0
libtpu: 0.0.40
codegen_flags: <defaults>
</compile_context>

<pallas_src>
import functools

import jax
import jax.numpy as jnp
import numpy as np
from jax import lax
from jax.experimental import pallas as pl
from jax.experimental.pallas import tpu as pltpu


_VMEM_LIMIT_BYTES = 48 * 1024 * 1024      # > 32 MiB scoped default, safe on v5e/v6e/v7x
_TILE_CANDIDATES = (512, 256, 128)        # 128-aligned tiles (clean MXU mapping on v5e too)


def _pick_tile(dim, candidates=_TILE_CANDIDATES):
    """Largest candidate tile that evenly divides `dim`; otherwise the full dim (no tiling)."""
    for c in candidates:
        if dim % c == 0:
            return c
    return dim


def _mosaic_params(*dim_semantics):
    return pltpu.CompilerParams(
        dimension_semantics=tuple(dim_semantics),
        vmem_limit_bytes=_VMEM_LIMIT_BYTES)


# ---------------------------------------------------------------------------
# Tiled linear (output projection):  y = x @ w_t + b
# ---------------------------------------------------------------------------
def _linear_kernel(x_ref, w_ref, b_ref, o_ref, acc_ref):
    kk = pl.program_id(2)

    @pl.when(kk == 0)
    def _init():
        acc_ref[...] = jnp.zeros_like(acc_ref)

    acc_ref[...] += jnp.dot(x_ref[...], w_ref[...],
                            preferred_element_type=jnp.float32)

    @pl.when(kk == pl.num_programs(2) - 1)
    def _finalize():
        o_ref[...] = (acc_ref[...] + b_ref[...].astype(jnp.float32)).astype(o_ref.dtype)


def linear(x, w_t, b):
    """y = x @ w_t + b  with x:(M,K), w_t:(K,Nout), b:(Nout,)."""
    M, K = x.shape
    Nout = w_t.shape[1]
    tm, tn, tk = _pick_tile(M), _pick_tile(Nout), _pick_tile(K)
    grid = (M // tm, Nout // tn, K // tk)
    return pl.pallas_call(
        _linear_kernel,
        out_shape=jax.ShapeDtypeStruct((M, Nout), x.dtype),
        grid_spec=pltpu.PrefetchScalarGridSpec(
            num_scalar_prefetch=0,
            grid=grid,
            in_specs=[
                pl.BlockSpec((tm, tk), lambda i, j, k: (i, k)),
                pl.BlockSpec((tk, tn), lambda i, j, k: (k, j)),
                pl.BlockSpec((1, tn), lambda i, j, k: (0, j)),
            ],
            out_specs=pl.BlockSpec((tm, tn), lambda i, j, k: (i, j)),
            scratch_shapes=[pltpu.VMEM((tm, tn), jnp.float32)]),
        compiler_params=_mosaic_params("parallel", "parallel", "arbitrary"),
    )(x, w_t, b.reshape(1, Nout))


# ---------------------------------------------------------------------------
# Fused qkv projection: one pass over x, three lane-dense outputs q/k/v
# (k has no bias: torch concatenates a zero k-bias, which is a no-op)
# ---------------------------------------------------------------------------
def _qkv_proj_kernel(x_ref, wq_ref, wk_ref, wv_ref, bq_ref, bv_ref,
                     q_ref, k_ref, v_ref, acc_q, acc_k, acc_v):
    kk = pl.program_id(2)

    @pl.when(kk == 0)
    def _init():
        acc_q[...] = jnp.zeros_like(acc_q)
        acc_k[...] = jnp.zeros_like(acc_k)
        acc_v[...] = jnp.zeros_like(acc_v)

    x = x_ref[...]
    acc_q[...] += jnp.dot(x, wq_ref[...], preferred_element_type=jnp.float32)
    acc_k[...] += jnp.dot(x, wk_ref[...], preferred_element_type=jnp.float32)
    acc_v[...] += jnp.dot(x, wv_ref[...], preferred_element_type=jnp.float32)

    @pl.when(kk == pl.num_programs(2) - 1)
    def _finalize():
        q_ref[...] = (acc_q[...] + bq_ref[...].astype(jnp.float32)).astype(q_ref.dtype)
        k_ref[...] = acc_k[...].astype(k_ref.dtype)
        v_ref[...] = (acc_v[...] + bv_ref[...].astype(jnp.float32)).astype(v_ref.dtype)


def qkv_projection(x, wq_t, wk_t, wv_t, bq, bv):
    M, K = x.shape
    D = wq_t.shape[1]
    tm, tn, tk = _pick_tile(M), _pick_tile(D), _pick_tile(K)
    grid = (M // tm, D // tn, K // tk)
    x_spec = pl.BlockSpec((tm, tk), lambda i, j, k: (i, k))
    w_spec = pl.BlockSpec((tk, tn), lambda i, j, k: (k, j))
    b_spec = pl.BlockSpec((1, tn), lambda i, j, k: (0, j))
    o_spec = pl.BlockSpec((tm, tn), lambda i, j, k: (i, j))
    out_sds = jax.ShapeDtypeStruct((M, D), x.dtype)
    return pl.pallas_call(
        _qkv_proj_kernel,
        out_shape=(out_sds, out_sds, out_sds),
        grid_spec=pltpu.PrefetchScalarGridSpec(
            num_scalar_prefetch=0,
            grid=grid,
            in_specs=[x_spec, w_spec, w_spec, w_spec, b_spec, b_spec],
            out_specs=(o_spec, o_spec, o_spec),
            scratch_shapes=[pltpu.VMEM((tm, tn), jnp.float32)] * 3),
        compiler_params=_mosaic_params("parallel", "parallel", "arbitrary"),
    )(x, wq_t, wk_t, wv_t, bq.reshape(1, D), bv.reshape(1, D))


# ---------------------------------------------------------------------------
# Flash-style attention: all heads of one batch per grid step, KV tiled on the
# second ("arbitrary") grid axis, online softmax in f32 scratch, lane-dense output.
# ---------------------------------------------------------------------------
def _attn_kernel(q_ref, k_ref, v_ref, o_ref, m_sc, l_sc, acc_sc,
                 *, num_heads, head_dim, reduce_heads):
    j = pl.program_id(1)

    @pl.when(j == 0)
    def _init():
        m_sc[...] = jnp.full(m_sc.shape, -jnp.inf, m_sc.dtype)
        l_sc[...] = jnp.zeros(l_sc.shape, l_sc.dtype)
        acc_sc[...] = jnp.zeros(acc_sc.shape, acc_sc.dtype)

    scale = head_dim ** -0.5
    q = q_ref[0]          # (N,   H*hd) in input dtype (stays resident across KV steps)
    k = k_ref[0]          # (tkv, H*hd)
    v = v_ref[0]          # (tkv, H*hd)

    for h in range(num_heads):
        lo, hi = h * head_dim, (h + 1) * head_dim
        qh = q[:, lo:hi] * scale                 # fold scale into q (N x hd elementwise)
        kh = k[:, lo:hi]
        vh = v[:, lo:hi]
        # Contract last dims of q and k directly (no explicit k.T).
        s = lax.dot_general(qh, kh, (((1,), (1,)), ((), ())),
                            preferred_element_type=jnp.float32)      # (N, tkv) f32
        m_prev = m_sc[h]                                             # (N, 1) f32
        m_new = jnp.maximum(m_prev, jnp.max(s, axis=-1, keepdims=True))
        alpha = jnp.exp(m_prev - m_new)
        p = jnp.exp(s - m_new)
        l_sc[h] = alpha * l_sc[h] + jnp.sum(p, axis=-1, keepdims=True)
        acc_sc[h] = alpha * acc_sc[h] + jnp.dot(
            p.astype(vh.dtype), vh, preferred_element_type=jnp.float32)
        m_sc[h] = m_new

    @pl.when(j == pl.num_programs(1) - 1)
    def _finalize():
        outs = [acc_sc[h] * pl.reciprocal(l_sc[h], approx=True)
                for h in range(num_heads)]
        if reduce_heads:
            # Fuse torch.mean(x, dim=1) (head-mean) into the kernel.
            total = outs[0]
            for t in outs[1:]:
                total = total + t
            o_ref[0] = (total * (1.0 / num_heads)).astype(o_ref.dtype)
        else:
            # Single lane-dense (N, H*hd) store -> no post-SDPA transpose in JAX.
            o_ref[0] = jnp.concatenate(outs, axis=-1).astype(o_ref.dtype)


def attention(q, k, v, *, num_heads, head_dim, reduce_heads):
    """q/k/v: (B, N, H*hd).  Returns (B, N, H*hd), or (B, N, hd) head-mean if reduce_heads."""
    B, N, D = q.shape
    tkv = _pick_tile(N)                       # KV tile; caps VMEM at O(N*tkv) for long N
    n_kv = N // tkv
    out_d = head_dim if reduce_heads else D
    q_spec = pl.BlockSpec((1, N, D), lambda b, j: (b, 0, 0))
    kv_spec = pl.BlockSpec((1, tkv, D), lambda b, j: (b, j, 0))
    out_spec = pl.BlockSpec((1, N, out_d), lambda b, j: (b, 0, 0))
    kernel = functools.partial(_attn_kernel, num_heads=num_heads,
                               head_dim=head_dim, reduce_heads=reduce_heads)
    return pl.pallas_call(
        kernel,
        out_shape=jax.ShapeDtypeStruct((B, N, out_d), q.dtype),
        grid_spec=pltpu.PrefetchScalarGridSpec(
            num_scalar_prefetch=0,
            grid=(B, n_kv),
            in_specs=[q_spec, kv_spec, kv_spec],
            out_specs=out_spec,
            scratch_shapes=[
                pltpu.VMEM((num_heads, N, 1), jnp.float32),          # running max m
                pltpu.VMEM((num_heads, N, 1), jnp.float32),          # running denom l
                pltpu.VMEM((num_heads, N, head_dim), jnp.float32)]), # running numerator
        compiler_params=_mosaic_params("parallel", "arbitrary"),
    )(q, k, v)


# ---------------------------------------------------------------------------
# Plain-JAX glue
# ---------------------------------------------------------------------------
def adaptive_avg_pool_last(x, out_size):
    """torch.nn.functional.adaptive_avg_pool1d over the last axis."""
    L = x.shape[-1]
    i = jnp.arange(out_size)
    starts = (i * L) // out_size
    ends = -((-(i + 1) * L) // out_size)
    idx = jnp.arange(L)
    mask = (idx[None, :] >= starts[:, None]) & (idx[None, :] < ends[:, None])
    w = mask.astype(x.dtype) / mask.sum(axis=1, keepdims=True).astype(x.dtype)
    return jnp.einsum('...l,ol->...o', x, w)


def init_params(key, in_dim, out_dim, num_heads, dtype=jnp.float32):
    d = in_dim if in_dim > out_dim else out_dim
    k1, k2, k3, k4, k5 = jax.random.split(key, 5)
    s_qkv = 1.0 / np.sqrt(in_dim)
    s_proj = 1.0 / np.sqrt(out_dim)
    w_qkv_t = jax.random.uniform(k1, (in_dim, 3 * d), dtype, minval=-s_qkv, maxval=s_qkv)
    return dict(
        # qkv weight stored pre-transposed and split into q/k/v column blocks:
        wq_t=w_qkv_t[:, :d],
        wk_t=w_qkv_t[:, d:2 * d],
        wv_t=w_qkv_t[:, 2 * d:],
        q_bias=jax.random.normal(k2, (d,), dtype) * 0.02,
        v_bias=jax.random.normal(k3, (d,), dtype) * 0.02,
        proj_w_t=jax.random.uniform(k4, (out_dim, out_dim), dtype,
                                    minval=-s_proj, maxval=s_proj),
        proj_b=jax.random.normal(k5, (out_dim,), dtype) * 0.02,
    )


def attention_forward(x, params, *, in_dim, out_dim, num_heads):
    """Pallas-backed forward, semantics identical to the PyTorch module."""
    B, N, C = x.shape
    d = in_dim if in_dim > out_dim else out_dim
    head_dim = d // num_heads
    reduce_heads = in_dim > out_dim

    x2 = x.reshape(B * N, C)
    q, k, v = qkv_projection(x2, params['wq_t'], params['wk_t'], params['wv_t'],
                             params['q_bias'], params['v_bias'])       # each (B*N, d)
    q = q.reshape(B, N, d)
    k = k.reshape(B, N, d)
    v = v.reshape(B, N, d)

    o = attention(q, k, v, num_heads=num_heads, head_dim=head_dim,
                  reduce_heads=reduce_heads)   # (B, N, d) or (B, N, head_dim)

    if reduce_heads and head_dim != out_dim:
        # TODO(synk): fold the adaptive_avg_pool1d weighting into proj_w_t (it is just a
        # (out_dim, head_dim) matmul); kept as a tiny JAX einsum for clarity.
        o = adaptive_avg_pool_last(o, out_dim)

    y = linear(o.reshape(B * N, out_dim), params['proj_w_t'], params['proj_b'])
    return y.reshape(B, N, out_dim)


def attention_reference(x, params, *, in_dim, out_dim, num_heads):
    """Pure-JAX reference mirroring the PyTorch forward for validation."""
    B, N, C = x.shape
    d = in_dim if in_dim > out_dim else out_dim
    hd = d // num_heads
    x2 = x.reshape(B * N, C)
    q = (x2 @ params['wq_t'] + params['q_bias']).reshape(B, N, num_heads, hd).transpose(0, 2, 1, 3)
    k = (x2 @ params['wk_t']).reshape(B, N, num_heads, hd).transpose(0, 2, 1, 3)
    v = (x2 @ params['wv_t'] + params['v_bias']).reshape(B, N, num_heads, hd).transpose(0, 2, 1, 3)
    s = jnp.einsum('bhqd,bhkd->bhqk', q, k) / np.sqrt(hd)
    p = jax.nn.softmax(s, axis=-1)
    o = jnp.einsum('bhqk,bhkd->bhqd', p, v)
    if in_dim > out_dim:
        o = jnp.mean(o, axis=1)
        if in_dim // num_heads != out_dim:
            o = adaptive_avg_pool_last(o, out_dim)
    else:
        o = o.transpose(0, 2, 1, 3).reshape(B, N, d)
    y = o.reshape(B * N, out_dim) @ params['proj_w_t'] + params['proj_b']
    return y.reshape(B, N, out_dim)


if __name__ == "__main__":
    key = jax.random.PRNGKey(0)

    def _run_case(case_key, B, N, in_dim, out_dim, H, rtol=2e-3, atol=2e-3):
        kx, kp = jax.random.split(case_key)
        x = jax.random.normal(kx, (B, N, in_dim), jnp.float32)
        params = init_params(kp, in_dim, out_dim, H)
        fwd = jax.jit(functools.partial(attention_forward, in_dim=in_dim,
                                        out_dim=out_dim, num_heads=H))
        y = jax.block_until_ready(fwd(x, params))
        y_ref = attention_reference(x, params, in_dim=in_dim, out_dim=out_dim, num_heads=H)
        assert y.shape == (B, N, out_dim)
        np.testing.assert_allclose(np.asarray(y), np.asarray(y_ref), rtol=rtol, atol=atol)

    k1, k2, k3 = jax.random.split(key, 3)

    # branch 1: in_dim <= out_dim (standard multi-head attention), single-tile grids
    _run_case(k1, B=2, N=8, in_dim=32, out_dim=32, H=4)

    # branch 2: in_dim > out_dim (fused head-mean + adaptive_avg_pool1d path)
    _run_case(k2, B=2, N=8, in_dim=64, out_dim=8, H=4)

    # larger case: exercises M/K/N matmul tiling (128-tiles) and multi-step online softmax
    # (3 KV blocks of 128), i.e. the flash accumulation path that keeps v7x within VMEM.
    _run_case(k3, B=2, N=384, in_dim=384, out_dim=384, H=6)

    print("KERNEL_OK")
</pallas_src>

<mosaic_0001>
module attributes {stable_mosaic.version = 11 : i64} {
  func.func @_linear_kernel(%arg0: i32, %arg1: i32, %arg2: i32, %arg3: memref<16x32xf32, #tpu.memory_space<vmem>>, %arg4: memref<32x32xf32, #tpu.memory_space<vmem>>, %arg5: memref<1x32xf32, #tpu.memory_space<vmem>>, %arg6: memref<16x32xf32, #tpu.memory_space<vmem>>, %arg7: memref<16x32xf32, #tpu.memory_space<vmem>>) attributes {dimension_semantics = [#tpu.dimension_semantics<parallel>, #tpu.dimension_semantics<parallel>, #tpu.dimension_semantics<arbitrary>], iteration_bounds = array<i64: 1, 1, 1>, scalar_prefetch = 0 : i64, scratch_operands = 1 : i64, tpu.core_type = #tpu.core_type<tc>, window_params = [{transform_indices = @transform_0, window_bounds = array<i64: 16, 32>}, {transform_indices = @transform_1, window_bounds = array<i64: 32, 32>}, {transform_indices = @transform_2, window_bounds = array<i64: 1, 32>}, {transform_indices = @transform_3, window_bounds = array<i64: 16, 32>}]} {
    %c0_i32 = arith.constant 0 : i32
    %0 = arith.cmpi eq, %arg2, %c0_i32 : i32
    %1 = arith.extui %0 : i1 to i32
    %c0_i32_0 = arith.constant 0 : i32
    %2 = arith.cmpi ne, %1, %c0_i32_0 : i32
    scf.if %2 {
      %cst_10 = arith.constant 0.000000e+00 : f32
      %12 = vector.broadcast %cst_10 : f32 to vector<16x32xf32>
      %c0_11 = arith.constant 0 : index
      %c0_12 = arith.constant 0 : index
      %13 = vector.load %arg7[%c0_11, %c0_12] : memref<16x32xf32, #tpu.memory_space<vmem>>, vector<16x32xf32>
      tpu.vector_store %arg7[%c0_11, %c0_12], %12 {strides = array<i32>} : memref<16x32xf32, #tpu.memory_space<vmem>>, vector<16x32xf32>,
    } else {
    }
    %c0 = arith.constant 0 : index
    %c0_1 = arith.constant 0 : index
    %3 = vector.load %arg7[%c0, %c0_1] : memref<16x32xf32, #tpu.memory_space<vmem>>, vector<16x32xf32>
    %c0_2 = arith.constant 0 : index
    %c0_3 = arith.constant 0 : index
    %4 = vector.load %arg3[%c0_2, %c0_3] : memref<16x32xf32, #tpu.memory_space<vmem>>, vector<16x32xf32>
    %c0_4 = arith.constant 0 : index
    %c0_5 = arith.constant 0 : index
    %5 = vector.load %arg4[%c0_4, %c0_5] : memref<32x32xf32, #tpu.memory_space<vmem>>, vector<32x32xf32>
    %cst = arith.constant dense<0.000000e+00> : vector<16x32xf32>
    %6 = tpu.matmul %4, %5, %cst {dimension_numbers = #tpu.dot_dimension_numbers<[1], [0], [0], [1], [0, 0, 1, 1], [], []>} : vector<16x32xf32>, vector<32x32xf32>, vector<16x32xf32> -> vector<16x32xf32>
    %7 = arith.addf %3, %6 : vector<16x32xf32>
    %c0_6 = arith.constant 0 : index
    %c0_7 = arith.constant 0 : index
    %8 = vector.load %arg7[%c0_6, %c0_7] : memref<16x32xf32, #tpu.memory_space<vmem>>, vector<16x32xf32>
    tpu.vector_store %arg7[%c0_6, %c0_7], %7 {strides = array<i32>} : memref<16x32xf32, #tpu.memory_space<vmem>>, vector<16x32xf32>,
    %c0_i32_8 = arith.constant 0 : i32
    %9 = arith.cmpi eq, %arg2, %c0_i32_8 : i32
    %10 = arith.extui %9 : i1 to i32
    %c0_i32_9 = arith.constant 0 : i32
    %11 = arith.cmpi ne, %10, %c0_i32_9 : i32
    scf.if %11 {
      %c0_10 = arith.constant 0 : index
      %c0_11 = arith.constant 0 : index
      %12 = vector.load %arg7[%c0_10, %c0_11] : memref<16x32xf32, #tpu.memory_space<vmem>>, vector<16x32xf32>
      %c0_12 = arith.constant 0 : index
      %c0_13 = arith.constant 0 : index
      %13 = vector.load %arg5[%c0_12, %c0_13] : memref<1x32xf32, #tpu.memory_space<vmem>>, vector<1x32xf32>
      %14 = vector.broadcast %13 : vector<1x32xf32> to vector<16x32xf32>
      %15 = arith.addf %12, %14 : vector<16x32xf32>
      %c0_14 = arith.constant 0 : index
      %c0_15 = arith.constant 0 : index
      %16 = vector.load %arg6[%c0_14, %c0_15] : memref<16x32xf32, #tpu.memory_space<vmem>>, vector<16x32xf32>
      tpu.vector_store %arg6[%c0_14, %c0_15], %15 {strides = array<i32>} : memref<16x32xf32, #tpu.memory_space<vmem>>, vector<16x32xf32>,
    } else {
    }
    return
  }
  func.func @transform_0(%arg0: i32, %arg1: i32, %arg2: i32) -> (i32, i32) {
    %c0_i32 = arith.constant 0 : i32
    return %arg0, %arg2 : i32, i32
  }
  func.func @transform_1(%arg0: i32, %arg1: i32, %arg2: i32) -> (i32, i32) {
    %c0_i32 = arith.constant 0 : i32
    return %arg2, %arg1 : i32, i32
  }
  func.func @transform_2(%arg0: i32, %arg1: i32, %arg2: i32) -> (i32, i32) {
    %c0_i32 = arith.constant 0 : i32
    %c0_i32_0 = arith.constant 0 : i32
    return %c0_i32, %arg1 : i32, i32
  }
  func.func @transform_3(%arg0: i32, %arg1: i32, %arg2: i32) -> (i32, i32) {
    %c0_i32 = arith.constant 0 : i32
    return %arg0, %arg1 : i32, i32
  }
}

module attributes {stable_mosaic.version = 11 : i64} {
  func.func @_qkv_proj_kernel(%arg0: i32, %arg1: i32, %arg2: i32, %arg3: memref<16x32xf32, #tpu.memory_space<vmem>>, %arg4: memref<32x32xf32, #tpu.memory_space<vmem>>, %arg5: memref<32x32xf32, #tpu.memory_space<vmem>>, %arg6: memref<32x32xf32, #tpu.memory_space<vmem>>, %arg7: memref<1x32xf32, #tpu.memory_space<vmem>>, %arg8: memref<1x32xf32, #tpu.memory_space<vmem>>, %arg9: memref<16x32xf32, #tpu.memory_space<vmem>>, %arg10: memref<16x32xf32, #tpu.memory_space<vmem>>, %arg11: memref<16x32xf32, #tpu.memory_space<vmem>>, %arg12: memref<16x32xf32, #tpu.memory_space<vmem>>, %arg13: memref<16x32xf32, #tpu.memory_space<vmem>>, %arg14: memref<16x32xf32, #tpu.memory_space<vmem>>) attributes {dimension_semantics = [#tpu.dimension_semantics<parallel>, #tpu.dimension_semantics<parallel>, #tpu.dimension_semantics<arbitrary>], iteration_bounds = array<i64: 1, 1, 1>, scalar_prefetch = 0 : i64, scratch_operands = 3 : i64, tpu.core_type = #tpu.core_type<tc>, window_params = [{transform_indices = @transform_0, window_bounds = array<i64: 16, 32>}, {transform_indices = @transform_1, window_bounds = array<i64: 32, 32>}, {transform_indices = @transform_2, window_bounds = array<i64: 32, 32>}, {transform_indices = @transform_3, window_bounds = array<i64: 32, 32>}, {transform_indices = @transform_4, window_bounds = array<i64: 1, 32>}, {transform_indices = @transform_5, window_bounds = array<i64: 1, 32>}, {transform_indices = @transform_6, window_bounds = array<i64: 16, 32>}, {transform_indices = @transform_7, window_bounds = array<i64: 16, 32>}, {transform_indices = @transform_8, window_bounds = array<i64: 16, 32>}]} {
    %c0_i32 = arith.constant 0 : i32
    %0 = arith.cmpi eq, %arg2, %c0_i32 : i32
    %1 = arith.extui %0 : i1 to i32
    %c0_i32_0 = arith.constant 0 : i32
    %2 = arith.cmpi ne, %1, %c0_i32_0 : i32
    scf.if %2 {
      %cst_24 = arith.constant 0.000000e+00 : f32
      %22 = vector.broadcast %cst_24 : f32 to vector<16x32xf32>
      %c0_25 = arith.constant 0 : index
      %c0_26 = arith.constant 0 : index
      %23 = vector.load %arg12[%c0_25, %c0_26] : memref<16x32xf32, #tpu.memory_space<vmem>>, vector<16x32xf32>
      tpu.vector_store %arg12[%c0_25, %c0_26], %22 {strides = array<i32>} : memref<16x32xf32, #tpu.memory_space<vmem>>, vector<16x32xf32>,
      %cst_27 = arith.constant 0.000000e+00 : f32
      %24 = vector.broadcast %cst_27 : f32 to vector<16x32xf32>
      %c0_28 = arith.constant 0 : index
      %c0_29 = arith.constant 0 : index
      %25 = vector.load %arg13[%c0_28, %c0_29] : memref<16x32xf32, #tpu.memory_space<vmem>>, vector<16x32xf32>
      tpu.vector_store %arg13[%c0_28, %c0_29], %24 {strides = array<i32>} : memref<16x32xf32, #tpu.memory_space<vmem>>, vector<16x32xf32>,
      %cst_30 = arith.constant 0.000000e+00 : f32
      %26 = vector.broadcast %cst_30 : f32 to vector<16x32xf32>
      %c0_31 = arith.constant 0 : index
      %c0_32 = arith.constant 0 : index
      %27 = vector.load %arg14[%c0_31, %c0_32] : memref<16x32xf32, #tpu.memory_space<vmem>>, vector<16x32xf32>
      tpu.vector_store %arg14[%c0_31, %c0_32], %26 {strides = array<i32>} : memref<16x32xf32, #tpu.memory_space<vmem>>, vector<16x32xf32>,
    } else {
    }
    %c0 = arith.constant 0 : index
    %c0_1 = arith.constant 0 : index
    %3 = vector.load %arg3[%c0, %c0_1] : memref<16x32xf32, #tpu.memory_space<vmem>>, vector<16x32xf32>
    %c0_2 = arith.constant 0 : index
    %c0_3 = arith.constant 0 : index
    %4 = vector.load %arg12[%c0_2, %c0_3] : memref<16x32xf32, #tpu.memory_space<vmem>>, vector<16x32xf32>
    %c0_4 = arith.constant 0 : index
    %c0_5 = arith.constant 0 : index
    %5 = vector.load %arg4[%c0_4, %c0_5] : memref<32x32xf32, #tpu.memory_space<vmem>>, vector<32x32xf32>
    %cst = arith.constant dense<0.000000e+00> : vector<16x32xf32>
    %6 = tpu.matmul %3, %5, %cst {dimension_numbers = #tpu.dot_dimension_numbers<[1], [0], [0], [1], [0, 0, 1, 1], [], []>} : vector<16x32xf32>, vector<32x32xf32>, vector<16x32xf32> -> vector<16x32xf32>
    %7 = arith.addf %4, %6 : vector<16x32xf32>
    %c0_6 = arith.constant 0 : index
    %c0_7 = arith.constant 0 : index
    %8 = vector.load %arg12[%c0_6, %c0_7] : memref<16x32xf32, #tpu.memory_space<vmem>>, vector<16x32xf32>
    tpu.vector_store %arg12[%c0_6, %c0_7], %7 {strides = array<i32>} : memref<16x32xf32, #tpu.memory_space<vmem>>, vector<16x32xf32>,
    %c0_8 = arith.constant 0 : index
    %c0_9 = arith.constant 0 : index
    %9 = vector.load %arg13[%c0_8, %c0_9] : memref<16x32xf32, #tpu.memory_space<vmem>>, vector<16x32xf32>
    %c0_10 = arith.constant 0 : index
    %c0_11 = arith.constant 0 : index
    %10 = vector.load %arg5[%c0_10, %c0_11] : memref<32x32xf32, #tpu.memory_space<vmem>>, vector<32x32xf32>
    %cst_12 = arith.constant dense<0.000000e+00> : vector<16x32xf32>
    %11 = tpu.matmul %3, %10, %cst_12 {dimension_numbers = #tpu.dot_dimension_numbers<[1], [0], [0], [1], [0, 0, 1, 1], [], []>} : vector<16x32xf32>, vector<32x32xf32>, vector<16x32xf32> -> vector<16x32xf32>
    %12 = arith.addf %9, %11 : vector<16x32xf32>
    %c0_13 = arith.constant 0 : index
    %c0_14 = arith.constant 0 : index
    %13 = vector.load %arg13[%c0_13, %c0_14] : memref<16x32xf32, #tpu.memory_space<vmem>>, vector<16x32xf32>
    tpu.vector_store %arg13[%c0_13, %c0_14], %12 {strides = array<i32>} : memref<16x32xf32, #tpu.memory_space<vmem>>, vector<16x32xf32>,
    %c0_15 = arith.constant 0 : index
    %c0_16 = arith.constant 0 : index
    %14 = vector.load %arg14[%c0_15, %c0_16] : memref<16x32xf32, #tpu.memory_space<vmem>>, vector<16x32xf32>
    %c0_17 = arith.constant 0 : index
    %c0_18 = arith.constant 0 : index
    %15 = vector.load %arg6[%c0_17, %c0_18] : memref<32x32xf32, #tpu.memory_space<vmem>>, vector<32x32xf32>
    %cst_19 = arith.constant dense<0.000000e+00> : vector<16x32xf32>
    %16 = tpu.matmul %3, %15, %cst_19 {dimension_numbers = #tpu.dot_dimension_numbers<[1], [0], [0], [1], [0, 0, 1, 1], [], []>} : vector<16x32xf32>, vector<32x32xf32>, vector<16x32xf32> -> vector<16x32xf32>
    %17 = arith.addf %14, %16 : vector<16x32xf32>
    %c0_20 = arith.constant 0 : index
    %c0_21 = arith.constant 0 : index
    %18 = vector.load %arg14[%c0_20, %c0_21] : memref<16x32xf32, #tpu.memory_space<vmem>>, vector<16x32xf32>
    tpu.vector_store %arg14[%c0_20, %c0_21], %17 {strides = array<i32>} : memref<16x32xf32, #tpu.memory_space<vmem>>, vector<16x32xf32>,
    %c0_i32_22 = arith.constant 0 : i32
    %19 = arith.cmpi eq, %arg2, %c0_i32_22 : i32
    %20 = arith.extui %19 : i1 to i32
    %c0_i32_23 = arith.constant 0 : i32
    %21 = arith.cmpi ne, %20, %c0_i32_23 : i32
    scf.if %21 {
      %c0_24 = arith.constant 0 : index
      %c0_25 = arith.constant 0 : index
      %22 = vector.load %arg12[%c0_24, %c0_25] : memref<16x32xf32, #tpu.memory_space<vmem>>, vector<16x32xf32>
      %c0_26 = arith.constant 0 : index
      %c0_27 = arith.constant 0 : index
      %23 = vector.load %arg7[%c0_26, %c0_27] : memref<1x32xf32, #tpu.memory_space<vmem>>, vector<1x32xf32>
      %24 = vector.broadcast %23 : vector<1x32xf32> to vector<16x32xf32>
      %25 = arith.addf %22, %24 : vector<16x32xf32>
      %c0_28 = arith.constant 0 : index
      %c0_29 = arith.constant 0 : index
      %26 = vector.load %arg9[%c0_28, %c0_29] : memref<16x32xf32, #tpu.memory_space<vmem>>, vector<16x32xf32>
      tpu.vector_store %arg9[%c0_28, %c0_29], %25 {strides = array<i32>} : memref<16x32xf32, #tpu.memory_space<vmem>>, vector<16x32xf32>,
      %c0_30 = arith.constant 0 : index
      %c0_31 = arith.constant 0 : index
      %27 = vector.load %arg13[%c0_30, %c0_31] : memref<16x32xf32, #tpu.memory_space<vmem>>, vector<16x32xf32>
      %c0_32 = arith.constant 0 : index
      %c0_33 = arith.constant 0 : index
      %28 = vector.load %arg10[%c0_32, %c0_33] : memref<16x32xf32, #tpu.memory_space<vmem>>, vector<16x32xf32>
      tpu.vector_store %arg10[%c0_32, %c0_33], %27 {strides = array<i32>} : memref<16x32xf32, #tpu.memory_space<vmem>>, vector<16x32xf32>,
      %c0_34 = arith.constant 0 : index
      %c0_35 = arith.constant 0 : index
      %29 = vector.load %arg14[%c0_34, %c0_35] : memref<16x32xf32, #tpu.memory_space<vmem>>, vector<16x32xf32>
      %c0_36 = arith.constant 0 : index
      %c0_37 = arith.constant 0 : index
      %30 = vector.load %arg8[%c0_36, %c0_37] : memref<1x32xf32, #tpu.memory_space<vmem>>, vector<1x32xf32>
      %31 = vector.broadcast %30 : vector<1x32xf32> to vector<16x32xf32>
      %32 = arith.addf %29, %31 : vector<16x32xf32>
      %c0_38 = arith.constant 0 : index
      %c0_39 = arith.constant 0 : index
      %33 = vector.load %arg11[%c0_38, %c0_39] : memref<16x32xf32, #tpu.memory_space<vmem>>, vector<16x32xf32>
      tpu.vector_store %arg11[%c0_38, %c0_39], %32 {strides = array<i32>} : memref<16x32xf32, #tpu.memory_space<vmem>>, vector<16x32xf32>,
    } else {
    }
    return
  }
  func.func @transform_0(%arg0: i32, %arg1: i32, %arg2: i32) -> (i32, i32) {
    %c0_i32 = arith.constant 0 : i32
    return %arg0, %arg2 : i32, i32
  }
  func.func @transform_1(%arg0: i32, %arg1: i32, %arg2: i32) -> (i32, i32) {
    %c0_i32 = arith.constant 0 : i32
    return %arg2, %arg1 : i32, i32
  }
  func.func @transform_2(%arg0: i32, %arg1: i32, %arg2: i32) -> (i32, i32) {
    %c0_i32 = arith.constant 0 : i32
    return %arg2, %arg1 : i32, i32
  }
  func.func @transform_3(%arg0: i32, %arg1: i32, %arg2: i32) -> (i32, i32) {
    %c0_i32 = arith.constant 0 : i32
    return %arg2, %arg1 : i32, i32
  }
  func.func @transform_4(%arg0: i32, %arg1: i32, %arg2: i32) -> (i32, i32) {
    %c0_i32 = arith.constant 0 : i32
    %c0_i32_0 = arith.constant 0 : i32
    return %c0_i32, %arg1 : i32, i32
  }
  func.func @transform_5(%arg0: i32, %arg1: i32, %arg2: i32) -> (i32, i32) {
    %c0_i32 = arith.constant 0 : i32
    %c0_i32_0 = arith.constant 0 : i32
    return %c0_i32, %arg1 : i32, i32
  }
  func.func @transform_6(%arg0: i32, %arg1: i32, %arg2: i32) -> (i32, i32) {
    %c0_i32 = arith.constant 0 : i32
    return %arg0, %arg1 : i32, i32
  }
  func.func @transform_7(%arg0: i32, %arg1: i32, %arg2: i32) -> (i32, i32) {
    %c0_i32 = arith.constant 0 : i32
    return %arg0, %arg1 : i32, i32
  }
  func.func @transform_8(%arg0: i32, %arg1: i32, %arg2: i32) -> (i32, i32) {
    %c0_i32 = arith.constant 0 : i32
    return %arg0, %arg1 : i32, i32
  }
}

module attributes {stable_mosaic.version = 11 : i64} {
  func.func @_attn_kernel(%arg0: i32, %arg1: i32, %arg2: memref<1x8x32xf32, #tpu.memory_space<vmem>>, %arg3: memref<1x8x32xf32, #tpu.memory_space<vmem>>, %arg4: memref<1x8x32xf32, #tpu.memory_space<vmem>>, %arg5: memref<1x8x32xf32, #tpu.memory_space<vmem>>, %arg6: memref<4x8x1xf32, #tpu.memory_space<vmem>>, %arg7: memref<4x8x1xf32, #tpu.memory_space<vmem>>, %arg8: memref<4x8x8xf32, #tpu.memory_space<vmem>>) attributes {dimension_semantics = [#tpu.dimension_semantics<parallel>, #tpu.dimension_semantics<arbitrary>], iteration_bounds = array<i64: 2, 1>, scalar_prefetch = 0 : i64, scratch_operands = 3 : i64, tpu.core_type = #tpu.core_type<tc>, window_params = [{transform_indices = @transform_0, window_bounds = array<i64: 1, 8, 32>}, {transform_indices = @transform_1, window_bounds = array<i64: 1, 8, 32>}, {transform_indices = @transform_2, window_bounds = array<i64: 1, 8, 32>}, {transform_indices = @transform_3, window_bounds = array<i64: 1, 8, 32>}]} {
    %c0_i32 = arith.constant 0 : i32
    %0 = arith.cmpi eq, %arg1, %c0_i32 : i32
    %1 = arith.extui %0 : i1 to i32
    %c0_i32_0 = arith.constant 0 : i32
    %2 = arith.cmpi ne, %1, %c0_i32_0 : i32
    scf.if %2 {
      %cst_99 = arith.constant 0xFF800000 : f32
      %160 = vector.broadcast %cst_99 : f32 to vector<4x8x1xf32>
      %c0_100 = arith.constant 0 : index
      %c0_101 = arith.constant 0 : index
      %c0_102 = arith.constant 0 : index
      %161 = vector.load %arg6[%c0_100, %c0_101, %c0_102] : memref<4x8x1xf32, #tpu.memory_space<vmem>>, vector<4x8x1xf32>
      tpu.vector_store %arg6[%c0_100, %c0_101, %c0_102], %160 {strides = array<i32>} : memref<4x8x1xf32, #tpu.memory_space<vmem>>, vector<4x8x1xf32>,
      %cst_103 = arith.constant 0.000000e+00 : f32
      %162 = vector.broadcast %cst_103 : f32 to vector<4x8x1xf32>
      %c0_104 = arith.constant 0 : index
      %c0_105 = arith.constant 0 : index
      %c0_106 = arith.constant 0 : index
      %163 = vector.load %arg7[%c0_104, %c0_105, %c0_106] : memref<4x8x1xf32, #tpu.memory_space<vmem>>, vector<4x8x1xf32>
      tpu.vector_store %arg7[%c0_104, %c0_105, %c0_106], %162 {strides = array<i32>} : memref<4x8x1xf32, #tpu.memory_space<vmem>>, vector<4x8x1xf32>,
      %cst_107 = arith.constant 0.000000e+00 : f32
      %164 = vector.broadcast %cst_107 : f32 to vector<4x8x8xf32>
      %c0_108 = arith.constant 0 : index
      %c0_109 = arith.constant 0 : index
      %c0_110 = arith.constant 0 : index
      %165 = vector.load %arg8[%c0_108, %c0_109, %c0_110] : memref<4x8x8xf32, #tpu.memory_space<vmem>>, vector<4x8x8xf32>
      tpu.vector_store %arg8[%c0_108, %c0_109, %c0_110], %164 {strides = array<i32>} : memref<4x8x8xf32, #tpu.memory_space<vmem>>, vector<4x8x8xf32>,
    } else {
    }
    %c0 = arith.constant 0 : index
    %c0_1 = arith.constant 0 : index
    %c0_2 = arith.constant 0 : index
    %3 = vector.load %arg2[%c0, %c0_1, %c0_2] : memref<1x8x32xf32, #tpu.memory_space<vmem>>, vector<1x8x32xf32>
    %4 = vector.shape_cast %3 : vector<1x8x32xf32> to vector<8x32xf32>
    %c0_3 = arith.constant 0 : index
    %c0_4 = arith.constant 0 : index
    %c0_5 = arith.constant 0 : index
    %5 = vector.load %arg3[%c0_3, %c0_4, %c0_5] : memref<1x8x32xf32, #tpu.memory_space<vmem>>, vector<1x8x32xf32>
    %6 = vector.shape_cast %5 : vector<1x8x32xf32> to vector<8x32xf32>
    %c0_6 = arith.constant 0 : index
    %c0_7 = arith.constant 0 : index
    %c0_8 = arith.constant 0 : index
    %7 = vector.load %arg4[%c0_6, %c0_7, %c0_8] : memref<1x8x32xf32, #tpu.memory_space<vmem>>, vector<1x8x32xf32>
    %8 = vector.shape_cast %7 : vector<1x8x32xf32> to vector<8x32xf32>
    %9 = vector.extract_strided_slice %4 {offsets = [0, 0], sizes = [8, 8], strides = [1, 1]} : vector<8x32xf32> to vector<8x8xf32>
    %cst = arith.constant 0.353553385 : f32
    %10 = vector.broadcast %cst : f32 to vector<8x8xf32>
    %11 = arith.mulf %9, %10 : vector<8x8xf32>
    %12 = vector.extract_strided_slice %6 {offsets = [0, 0], sizes = [8, 8], strides = [1, 1]} : vector<8x32xf32> to vector<8x8xf32>
    %13 = vector.extract_strided_slice %8 {offsets = [0, 0], sizes = [8, 8], strides = [1, 1]} : vector<8x32xf32> to vector<8x8xf32>
    %cst_9 = arith.constant dense<0.000000e+00> : vector<8x8xf32>
    %14 = tpu.matmul %11, %12, %cst_9 {dimension_numbers = #tpu.dot_dimension_numbers<[1], [1], [0], [0], [0, 0, 1, 0], [], []>} : vector<8x8xf32>, vector<8x8xf32>, vector<8x8xf32> -> vector<8x8xf32>
    %c0_10 = arith.constant 0 : index
    %c0_11 = arith.constant 0 : index
    %c0_12 = arith.constant 0 : index
    %15 = vector.load %arg6[%c0_10, %c0_11, %c0_12] : memref<4x8x1xf32, #tpu.memory_space<vmem>>, vector<1x8x1xf32>
    %16 = vector.shape_cast %15 : vector<1x8x1xf32> to vector<8x1xf32>
    %cst_13 = arith.constant dense<0xFF800000> : vector<8xf32>
    %17 = vector.multi_reduction <maximumf>, %14, %cst_13 [1] : vector<8x8xf32> to vector<8xf32>
    %18 = vector.shape_cast %17 : vector<8xf32> to vector<8x1xf32>
    %19 = arith.maximumf %16, %18 : vector<8x1xf32>
    %20 = arith.subf %16, %19 : vector<8x1xf32>
    %21 = math.exp %20 : vector<8x1xf32>
    %22 = vector.broadcast %19 : vector<8x1xf32> to vector<8x8xf32>
    %23 = arith.subf %14, %22 : vector<8x8xf32>
    %24 = math.exp %23 : vector<8x8xf32>
    %c0_14 = arith.constant 0 : index
    %c0_15 = arith.constant 0 : index
    %c0_16 = arith.constant 0 : index
    %25 = vector.load %arg7[%c0_14, %c0_15, %c0_16] : memref<4x8x1xf32, #tpu.memory_space<vmem>>, vector<1x8x1xf32>
    %26 = vector.shape_cast %25 : vector<1x8x1xf32> to vector<8x1xf32>
    %27 = arith.mulf %21, %26 : vector<8x1xf32>
    %cst_17 = arith.constant dense<0.000000e+00> : vector<8xf32>
    %28 = vector.multi_reduction <add>, %24, %cst_17 [1] : vector<8x8xf32> to vector<8xf32>
    %29 = vector.shape_cast %28 : vector<8xf32> to vector<8x1xf32>
    %30 = arith.addf %27, %29 : vector<8x1xf32>
    %c0_18 = arith.constant 0 : index
    %c0_19 = arith.constant 0 : index
    %c0_20 = arith.constant 0 : index
    %31 = vector.load %arg7[%c0_18, %c0_19, %c0_20] : memref<4x8x1xf32, #tpu.memory_space<vmem>>, vector<1x8x1xf32>
    %32 = vector.shape_cast %31 : vector<1x8x1xf32> to vector<8x1xf32>
    %33 = vector.shape_cast %30 : vector<8x1xf32> to vector<1x8x1xf32>
    tpu.vector_store %arg7[%c0_18, %c0_19, %c0_20], %33 {strides = array<i32>} : memref<4x8x1xf32, #tpu.memory_space<vmem>>, vector<1x8x1xf32>,
    %c0_21 = arith.constant 0 : index
    %c0_22 = arith.constant 0 : index
    %c0_23 = arith.constant 0 : index
    %34 = vector.load %arg8[%c0_21, %c0_22, %c0_23] : memref<4x8x8xf32, #tpu.memory_space<vmem>>, vector<1x8x8xf32>
    %35 = vector.shape_cast %34 : vector<1x8x8xf32> to vector<8x8xf32>
    %36 = vector.broadcast %21 : vector<8x1xf32> to vector<8x8xf32>
    %37 = arith.mulf %36, %35 : vector<8x8xf32>
    %cst_24 = arith.constant dense<0.000000e+00> : vector<8x8xf32>
    %38 = tpu.matmul %24, %13, %cst_24 {dimension_numbers = #tpu.dot_dimension_numbers<[1], [0], [0], [1], [0, 0, 1, 1], [], []>} : vector<8x8xf32>, vector<8x8xf32>, vector<8x8xf32> -> vector<8x8xf32>
    %39 = arith.addf %37, %38 : vector<8x8xf32>
    %c0_25 = arith.constant 0 : index
    %c0_26 = arith.constant 0 : index
    %c0_27 = arith.constant 0 : index
    %40 = vector.load %arg8[%c0_25, %c0_26, %c0_27] : memref<4x8x8xf32, #tpu.memory_space<vmem>>, vector<1x8x8xf32>
    %41 = vector.shape_cast %40 : vector<1x8x8xf32> to vector<8x8xf32>
    %42 = vector.shape_cast %39 : vector<8x8xf32> to vector<1x8x8xf32>
    tpu.vector_store %arg8[%c0_25, %c0_26, %c0_27], %42 {strides = array<i32>} : memref<4x8x8xf32, #tpu.memory_space<vmem>>, vector<1x8x8xf32>,
    %c0_28 = arith.constant 0 : index
    %c0_29 = arith.constant 0 : index
    %c0_30 = arith.constant 0 : index
    %43 = vector.load %arg6[%c0_28, %c0_29, %c0_30] : memref<4x8x1xf32, #tpu.memory_space<vmem>>, vector<1x8x1xf32>
    %44 = vector.shape_cast %43 : vector<1x8x1xf32> to vector<8x1xf32>
    %45 = vector.shape_cast %19 : vector<8x1xf32> to vector<1x8x1xf32>
    tpu.vector_store %arg6[%c0_28, %c0_29, %c0_30], %45 {strides = array<i32>} : memref<4x8x1xf32, #tpu.memory_space<vmem>>, vector<1x8x1xf32>,
    %46 = vector.extract_strided_slice %4 {offsets = [0, 8], sizes = [8, 8], strides = [1, 1]} : vector<8x32xf32> to vector<8x8xf32>
    %cst_31 = arith.constant 0.353553385 : f32
    %47 = vector.broadcast %cst_31 : f32 to vector<8x8xf32>
    %48 = arith.mulf %46, %47 : vector<8x8xf32>
    %49 = vector.extract_strided_slice %6 {offsets = [0, 8], sizes = [8, 8], strides = [1, 1]} : vector<8x32xf32> to vector<8x8xf32>
    %50 = vector.extract_strided_slice %8 {offsets = [0, 8], sizes = [8, 8], strides = [1, 1]} : vector<8x32xf32> to vector<8x8xf32>
    %cst_32 = arith.constant dense<0.000000e+00> : vector<8x8xf32>
    %51 = tpu.matmul %48, %49, %cst_32 {dimension_numbers = #tpu.dot_dimension_numbers<[1], [1], [0], [0], [0, 0, 1, 0], [], []>} : vector<8x8xf32>, vector<8x8xf32>, vector<8x8xf32> -> vector<8x8xf32>
    %c1 = arith.constant 1 : index
    %c0_33 = arith.constant 0 : index
    %c0_34 = arith.constant 0 : index
    %52 = vector.load %arg6[%c1, %c0_33, %c0_34] : memref<4x8x1xf32, #tpu.memory_space<vmem>>, vector<1x8x1xf32>
    %53 = vector.shape_cast %52 : vector<1x8x1xf32> to vector<8x1xf32>
    %cst_35 = arith.constant dense<0xFF800000> : vector<8xf32>
    %54 = vector.multi_reduction <maximumf>, %51, %cst_35 [1] : vector<8x8xf32> to vector<8xf32>
    %55 = vector.shape_cast %54 : vector<8xf32> to vector<8x1xf32>
    %56 = arith.maximumf %53, %55 : vector<8x1xf32>
    %57 = arith.subf %53, %56 : vector<8x1xf32>
    %58 = math.exp %57 : vector<8x1xf32>
    %59 = vector.broadcast %56 : vector<8x1xf32> to vector<8x8xf32>
    %60 = arith.subf %51, %59 : vector<8x8xf32>
    %61 = math.exp %60 : vector<8x8xf32>
    %c1_36 = arith.constant 1 : index
    %c0_37 = arith.constant 0 : index
    %c0_38 = arith.constant 0 : index
    %62 = vector.load %arg7[%c1_36, %c0_37, %c0_38] : memref<4x8x1xf32, #tpu.memory_space<vmem>>, vector<1x8x1xf32>
    %63 = vector.shape_cast %62 : vector<1x8x1xf32> to vector<8x1xf32>
    %64 = arith.mulf %58, %63 : vector<8x1xf32>
    %cst_39 = arith.constant dense<0.000000e+00> : vector<8xf32>
    %65 = vector.multi_reduction <add>, %61, %cst_39 [1] : vector<8x8xf32> to vector<8xf32>
    %66 = vector.shape_cast %65 : vector<8xf32> to vector<8x1xf32>
    %67 = arith.addf %64, %66 : vector<8x1xf32>
    %c1_40 = arith.constant 1 : index
    %c0_41 = arith.constant 0 : index
    %c0_42 = arith.constant 0 : index
    %68 = vector.load %arg7[%c1_40, %c0_41, %c0_42] : memref<4x8x1xf32, #tpu.memory_space<vmem>>, vector<1x8x1xf32>
    %69 = vector.shape_cast %68 : vector<1x8x1xf32> to vector<8x1xf32>
    %70 = vector.shape_cast %67 : vector<8x1xf32> to vector<1x8x1xf32>
    tpu.vector_store %arg7[%c1_40, %c0_41, %c0_42], %70 {strides = array<i32>} : memref<4x8x1xf32, #tpu.memory_space<vmem>>, vector<1x8x1xf32>,
    %c1_43 = arith.constant 1 : index
    %c0_44 = arith.constant 0 : index
    %c0_45 = arith.constant 0 : index
    %71 = vector.load %arg8[%c1_43, %c0_44, %c0_45] : memref<4x8x8xf32, #tpu.memory_space<vmem>>, vector<1x8x8xf32>
    %72 = vector.shape_cast %71 : vector<1x8x8xf32> to vector<8x8xf32>
    %73 = vector.broadcast %58 : vector<8x1xf32> to vector<8x8xf32>
    %74 = arith.mulf %73, %72 : vector<8x8xf32>
    %cst_46 = arith.constant dense<0.000000e+00> : vector<8x8xf32>
    %75 = tpu.matmul %61, %50, %cst_46 {dimension_numbers = #tpu.dot_dimension_numbers<[1], [0], [0], [1], [0, 0, 1, 1], [], []>} : vector<8x8xf32>, vector<8x8xf32>, vector<8x8xf32> -> vector<8x8xf32>
    %76 = arith.addf %74, %75 : vector<8x8xf32>
    %c1_47 = arith.constant 1 : index
    %c0_48 = arith.constant 0 : index
    %c0_49 = arith.constant 0 : index
    %77 = vector.load %arg8[%c1_47, %c0_48, %c0_49] : memref<4x8x8xf32, #tpu.memory_space<vmem>>, vector<1x8x8xf32>
    %78 = vector.shape_cast %77 : vector<1x8x8xf32> to vector<8x8xf32>
    %79 = vector.shape_cast %76 : vector<8x8xf32> to vector<1x8x8xf32>
    tpu.vector_store %arg8[%c1_47, %c0_48, %c0_49], %79 {strides = array<i32>} : memref<4x8x8xf32, #tpu.memory_space<vmem>>, vector<1x8x8xf32>,
    %c1_50 = arith.constant 1 : index
    %c0_51 = arith.constant 0 : index
    %c0_52 = arith.constant 0 : index
    %80 = vector.load %arg6[%c1_50, %c0_51, %c0_52] : memref<4x8x1xf32, #tpu.memory_space<vmem>>, vector<1x8x1xf32>
    %81 = vector.shape_cast %80 : vector<1x8x1xf32> to vector<8x1xf32>
    %82 = vector.shape_cast %56 : vector<8x1xf32> to vector<1x8x1xf32>
    tpu.vector_store %arg6[%c1_50, %c0_51, %c0_52], %82 {strides = array<i32>} : memref<4x8x1xf32, #tpu.memory_space<vmem>>, vector<1x8x1xf32>,
    %83 = vector.extract_strided_slice %4 {offsets = [0, 16], sizes = [8, 8], strides = [1, 1]} : vector<8x32xf32> to vector<8x8xf32>
    %cst_53 = arith.constant 0.353553385 : f32
    %84 = vector.broadcast %cst_53 : f32 to vector<8x8xf32>
    %85 = arith.mulf %83, %84 : vector<8x8xf32>
    %86 = vector.extract_strided_slice %6 {offsets = [0, 16], sizes = [8, 8], strides = [1, 1]} : vector<8x32xf32> to vector<8x8xf32>
    %87 = vector.extract_strided_slice %8 {offsets = [0, 16], sizes = [8, 8], strides = [1, 1]} : vector<8x32xf32> to vector<8x8xf32>
    %cst_54 = arith.constant dense<0.000000e+00> : vector<8x8xf32>
    %88 = tpu.matmul %85, %86, %cst_54 {dimension_numbers = #tpu.dot_dimension_numbers<[1], [1], [0], [0], [0, 0, 1, 0], [], []>} : vector<8x8xf32>, vector<8x8xf32>, vector<8x8xf32> -> vector<8x8xf32>
    %c2 = arith.constant 2 : index
    %c0_55 = arith.constant 0 : index
    %c0_56 = arith.constant 0 : index
    %89 = vector.load %arg6[%c2, %c0_55, %c0_56] : memref<4x8x1xf32, #tpu.memory_space<vmem>>, vector<1x8x1xf32>
    %90 = vector.shape_cast %89 : vector<1x8x1xf32> to vector<8x1xf32>
    %cst_57 = arith.constant dense<0xFF800000> : vector<8xf32>
    %91 = vector.multi_reduction <maximumf>, %88, %cst_57 [1] : vector<8x8xf32> to vector<8xf32>
    %92 = vector.shape_cast %91 : vector<8xf32> to vector<8x1xf32>
    %93 = arith.maximumf %90, %92 : vector<8x1xf32>
    %94 = arith.subf %90, %93 : vector<8x1xf32>
    %95 = math.exp %94 : vector<8x1xf32>
    %96 = vector.broadcast %93 : vector<8x1xf32> to vector<8x8xf32>
    %97 = arith.subf %88, %96 : vector<8x8xf32>
    %98 = math.exp %97 : vector<8x8xf32>
    %c2_58 = arith.constant 2 : index
    %c0_59 = arith.constant 0 : index
    %c0_60 = arith.constant 0 : index
    %99 = vector.load %arg7[%c2_58, %c0_59, %c0_60] : memref<4x8x1xf32, #tpu.memory_space<vmem>>, vector<1x8x1xf32>
    %100 = vector.shape_cast %99 : vector<1x8x1xf32> to vector<8x1xf32>
    %101 = arith.mulf %95, %100 : vector<8x1xf32>
    %cst_61 = arith.constant dense<0.000000e+00> : vector<8xf32>
    %102 = vector.multi_reduction <add>, %98, %cst_61 [1] : vector<8x8xf32> to vector<8xf32>
    %103 = vector.shape_cast %102 : vector<8xf32> to vector<8x1xf32>
    %104 = arith.addf %101, %103 : vector<8x1xf32>
    %c2_62 = arith.constant 2 : index
    %c0_63 = arith.constant 0 : index
    %c0_64 = arith.constant 0 : index
    %105 = vector.load %arg7[%c2_62, %c0_63, %c0_64] : memref<4x8x1xf32, #tpu.memory_space<vmem>>, vector<1x8x1xf32>
    %106 = vector.shape_cast %105 : vector<1x8x1xf32> to vector<8x1xf32>
    %107 = vector.shape_cast %104 : vector<8x1xf32> to vector<1x8x1xf32>
    tpu.vector_store %arg7[%c2_62, %c0_63, %c0_64], %107 {strides = array<i32>} : memref<4x8x1xf32, #tpu.memory_space<vmem>>, vector<1x8x1xf32>,
    %c2_65 = arith.constant 2 : index
    %c0_66 = arith.constant 0 : index
    %c0_67 = arith.constant 0 : index
    %108 = vector.load %arg8[%c2_65, %c0_66, %c0_67] : memref<4x8x8xf32, #tpu.memory_space<vmem>>, vector<1x8x8xf32>
    %109 = vector.shape_cast %108 : vector<1x8x8xf32> to vector<8x8xf32>
    %110 = vector.broadcast %95 : vector<8x1xf32> to vector<8x8xf32>
    %111 = arith.mulf %110, %109 : vector<8x8xf32>
    %cst_68 = arith.constant dense<0.000000e+00> : vector<8x8xf32>
    %112 = tpu.matmul %98, %87, %cst_68 {dimension_numbers = #tpu.dot_dimension_numbers<[1], [0], [0], [1], [0, 0, 1, 1], [], []>} : vector<8x8xf32>, vector<8x8xf32>, vector<8x8xf32> -> vector<8x8xf32>
    %113 = arith.addf %111, %112 : vector<8x8xf32>
    %c2_69 = arith.constant 2 : index
    %c0_70 = arith.constant 0 : index
    %c0_71 = arith.constant 0 : index
    %114 = vector.load %arg8[%c2_69, %c0_70, %c0_71] : memref<4x8x8xf32, #tpu.memory_space<vmem>>, vector<1x8x8xf32>
    %115 = vector.shape_cast %114 : vector<1x8x8xf32> to vector<8x8xf32>
    %116 = vector.shape_cast %113 : vector<8x8xf32> to vector<1x8x8xf32>
    tpu.vector_store %arg8[%c2_69, %c0_70, %c0_71], %116 {strides = array<i32>} : memref<4x8x8xf32, #tpu.memory_space<vmem>>, vector<1x8x8xf32>,
    %c2_72 = arith.constant 2 : index
    %c0_73 = arith.constant 0 : index
    %c0_74 = arith.constant 0 : index
    %117 = vector.load %arg6[%c2_72, %c0_73, %c0_74] : memref<4x8x1xf32, #tpu.memory_space<vmem>>, vector<1x8x1xf32>
    %118 = vector.shape_cast %117 : vector<1x8x1xf32> to vector<8x1xf32>
    %119 = vector.shape_cast %93 : vector<8x1xf32> to vector<1x8x1xf32>
    tpu.vector_store %arg6[%c2_72, %c0_73, %c0_74], %119 {strides = array<i32>} : memref<4x8x1xf32, #tpu.memory_space<vmem>>, vector<1x8x1xf32>,
    %120 = vector.extract_strided_slice %4 {offsets = [0, 24], sizes = [8, 8], strides = [1, 1]} : vector<8x32xf32> to vector<8x8xf32>
    %cst_75 = arith.constant 0.353553385 : f32
    %121 = vector.broadcast %cst_75 : f32 to vector<8x8xf32>
    %122 = arith.mulf %120, %121 : vector<8x8xf32>
    %123 = vector.extract_strided_slice %6 {offsets = [0, 24], sizes = [8, 8], strides = [1, 1]} : vector<8x32xf32> to vector<8x8xf32>
    %124 = vector.extract_strided_slice %8 {offsets = [0, 24], sizes = [8, 8], strides = [1, 1]} : vector<8x32xf32> to vector<8x8xf32>
    %cst_76 = arith.constant dense<0.000000e+00> : vector<8x8xf32>
    %125 = tpu.matmul %122, %123, %cst_76 {dimension_numbers = #tpu.dot_dimension_numbers<[1], [1], [0], [0], [0, 0, 1, 0], [], []>} : vector<8x8xf32>, vector<8x8xf32>, vector<8x8xf32> -> vector<8x8xf32>
    %c3 = arith.constant 3 : index
    %c0_77 = arith.constant 0 : index
    %c0_78 = arith.constant 0 : index
    %126 = vector.load %arg6[%c3, %c0_77, %c0_78] : memref<4x8x1xf32, #tpu.memory_space<vmem>>, vector<1x8x1xf32>
    %127 = vector.shape_cast %126 : vector<1x8x1xf32> to vector<8x1xf32>
    %cst_79 = arith.constant dense<0xFF800000> : vector<8xf32>
    %128 = vector.multi_reduction <maximumf>, %125, %cst_79 [1] : vector<8x8xf32> to vector<8xf32>
    %129 = vector.shape_cast %128 : vector<8xf32> to vector<8x1xf32>
    %130 = arith.maximumf %127, %129 : vector<8x1xf32>
    %131 = arith.subf %127, %130 : vector<8x1xf32>
    %132 = math.exp %131 : vector<8x1xf32>
    %133 = vector.broadcast %130 : vector<8x1xf32> to vector<8x8xf32>
    %134 = arith.subf %125, %133 : vector<8x8xf32>
    %135 = math.exp %134 : vector<8x8xf32>
    %c3_80 = arith.constant 3 : index
    %c0_81 = arith.constant 0 : index
    %c0_82 = arith.constant 0 : index
    %136 = vector.load %arg7[%c3_80, %c0_81, %c0_82] : memref<4x8x1xf32, #tpu.memory_space<vmem>>, vector<1x8x1xf32>
    %137 = vector.shape_cast %136 : vector<1x8x1xf32> to vector<8x1xf32>
    %138 = arith.mulf %132, %137 : vector<8x1xf32>
    %cst_83 = arith.constant dense<0.000000e+00> : vector<8xf32>
    %139 = vector.multi_reduction <add>, %135, %cst_83 [1] : vector<8x8xf32> to vector<8xf32>
    %140 = vector.shape_cast %139 : vector<8xf32> to vector<8x1xf32>
    %141 = arith.addf %138, %140 : vector<8x1xf32>
    %c3_84 = arith.constant 3 : index
    %c0_85 = arith.constant 0 : index
    %c0_86 = arith.constant 0 : index
    %142 = vector.load %arg7[%c3_84, %c0_85, %c0_86] : memref<4x8x1xf32, #tpu.memory_space<vmem>>, vector<1x8x1xf32>
    %143 = vector.shape_cast %142 : vector<1x8x1xf32> to vector<8x1xf32>
    %144 = vector.shape_cast %141 : vector<8x1xf32> to vector<1x8x1xf32>
    tpu.vector_store %arg7[%c3_84, %c0_85, %c0_86], %144 {strides = array<i32>} : memref<4x8x1xf32, #tpu.memory_space<vmem>>, vector<1x8x1xf32>,
    %c3_87 = arith.constant 3 : index
    %c0_88 = arith.constant 0 : index
    %c0_89 = arith.constant 0 : index
    %145 = vector.load %arg8[%c3_87, %c0_88, %c0_89] : memref<4x8x8xf32, #tpu.memory_space<vmem>>, vector<1x8x8xf32>
    %146 = vector.shape_cast %145 : vector<1x8x8xf32> to vector<8x8xf32>
    %147 = vector.broadcast %132 : vector<8x1xf32> to vector<8x8xf32>
    %148 = arith.mulf %147, %146 : vector<8x8xf32>
    %cst_90 = arith.constant dense<0.000000e+00> : vector<8x8xf32>
    %149 = tpu.matmul %135, %124, %cst_90 {dimension_numbers = #tpu.dot_dimension_numbers<[1], [0], [0], [1], [0, 0, 1, 1], [], []>} : vector<8x8xf32>, vector<8x8xf32>, vector<8x8xf32> -> vector<8x8xf32>
    %150 = arith.addf %148, %149 : vector<8x8xf32>
    %c3_91 = arith.constant 3 : index
    %c0_92 = arith.constant 0 : index
    %c0_93 = arith.constant 0 : index
    %151 = vector.load %arg8[%c3_91, %c0_92, %c0_93] : memref<4x8x8xf32, #tpu.memory_space<vmem>>, vector<1x8x8xf32>
    %152 = vector.shape_cast %151 : vector<1x8x8xf32> to vector<8x8xf32>
    %153 = vector.shape_cast %150 : vector<8x8xf32> to vector<1x8x8xf32>
    tpu.vector_store %arg8[%c3_91, %c0_92, %c0_93], %153 {strides = array<i32>} : memref<4x8x8xf32, #tpu.memory_space<vmem>>, vector<1x8x8xf32>,
    %c3_94 = arith.constant 3 : index
    %c0_95 = arith.constant 0 : index
    %c0_96 = arith.constant 0 : index
    %154 = vector.load %arg6[%c3_94, %c0_95, %c0_96] : memref<4x8x1xf32, #tpu.memory_space<vmem>>, vector<1x8x1xf32>
    %155 = vector.shape_cast %154 : vector<1x8x1xf32> to vector<8x1xf32>
    %156 = vector.shape_cast %130 : vector<8x1xf32> to vector<1x8x1xf32>
    tpu.vector_store %arg6[%c3_94, %c0_95, %c0_96], %156 {strides = array<i32>} : memref<4x8x1xf32, #tpu.memory_space<vmem>>, vector<1x8x1xf32>,
    %c0_i32_97 = arith.constant 0 : i32
    %157 = arith.cmpi eq, %arg1, %c0_i32_97 : i32
    %158 = arith.extui %157 : i1 to i32
    %c0_i32_98 = arith.constant 0 : i32
    %159 = arith.cmpi ne, %158, %c0_i32_98 : i32
    scf.if %159 {
      %c0_99 = arith.constant 0 : index
      %c0_100 = arith.constant 0 : index
      %c0_101 = arith.constant 0 : index
      %160 = vector.load %arg8[%c0_99, %c0_100, %c0_101] : memref<4x8x8xf32, #tpu.memory_space<vmem>>, vector<1x8x8xf32>
      %161 = vector.shape_cast %160 : vector<1x8x8xf32> to vector<8x8xf32>
      %c0_102 = arith.constant 0 : index
      %c0_103 = arith.constant 0 : index
      %c0_104 = arith.constant 0 : index
      %162 = vector.load %arg7[%c0_102, %c0_103, %c0_104] : memref<4x8x1xf32, #tpu.memory_space<vmem>>, vector<1x8x1xf32>
      %163 = vector.shape_cast %162 : vector<1x8x1xf32> to vector<8x1xf32>
      %164 = tpu.reciprocal %163 {approx = true} : vector<8x1xf32> -> vector<8x1xf32>
      %165 = vector.broadcast %164 : vector<8x1xf32> to vector<8x8xf32>
      %166 = arith.mulf %161, %165 : vector<8x8xf32>
      %c1_105 = arith.constant 1 : index
      %c0_106 = arith.constant 0 : index
      %c0_107 = arith.constant 0 : index
      %167 = vector.load %arg8[%c1_105, %c0_106, %c0_107] : memref<4x8x8xf32, #tpu.memory_space<vmem>>, vector<1x8x8xf32>
      %168 = vector.shape_cast %167 : vector<1x8x8xf32> to vector<8x8xf32>
      %c1_108 = arith.constant 1 : index
      %c0_109 = arith.constant 0 : index
      %c0_110 = arith.constant 0 : index
      %169 = vector.load %arg7[%c1_108, %c0_109, %c0_110] : memref<4x8x1xf32, #tpu.memory_space<vmem>>, vector<1x8x1xf32>
      %170 = vector.shape_cast %169 : vector<1x8x1xf32> to vector<8x1xf32>
      %171 = tpu.reciprocal %170 {approx = true} : vector<8x1xf32> -> vector<8x1xf32>
      %172 = vector.broadcast %171 : vector<8x1xf32> to vector<8x8xf32>
      %173 = arith.mulf %168, %172 : vector<8x8xf32>
      %c2_111 = arith.constant 2 : index
      %c0_112 = arith.constant 0 : index
      %c0_113 = arith.constant 0 : index
      %174 = vector.load %arg8[%c2_111, %c0_112, %c0_113] : memref<4x8x8xf32, #tpu.memory_space<vmem>>, vector<1x8x8xf32>
      %175 = vector.shape_cast %174 : vector<1x8x8xf32> to vector<8x8xf32>
      %c2_114 = arith.constant 2 : index
      %c0_115 = arith.constant 0 : index
      %c0_116 = arith.constant 0 : index
      %176 = vector.load %arg7[%c2_114, %c0_115, %c0_116] : memref<4x8x1xf32, #tpu.memory_space<vmem>>, vector<1x8x1xf32>
      %177 = vector.shape_cast %176 : vector<1x8x1xf32> to vector<8x1xf32>
      %178 = tpu.reciprocal %177 {approx = true} : vector<8x1xf32> -> vector<8x1xf32>
      %179 = vector.broadcast %178 : vector<8x1xf32> to vector<8x8xf32>
      %180 = arith.mulf %175, %179 : vector<8x8xf32>
      %c3_117 = arith.constant 3 : index
      %c0_118 = arith.constant 0 : index
      %c0_119 = arith.constant 0 : index
      %181 = vector.load %arg8[%c3_117, %c0_118, %c0_119] : memref<4x8x8xf32, #tpu.memory_space<vmem>>, vector<1x8x8xf32>
      %182 = vector.shape_cast %181 : vector<1x8x8xf32> to vector<8x8xf32>
      %c3_120 = arith.constant 3 : index
      %c0_121 = arith.constant 0 : index
      %c0_122 = arith.constant 0 : index
      %183 = vector.load %arg7[%c3_120, %c0_121, %c0_122] : memref<4x8x1xf32, #tpu.memory_space<vmem>>, vector<1x8x1xf32>
      %184 = vector.shape_cast %183 : vector<1x8x1xf32> to vector<8x1xf32>
      %185 = tpu.reciprocal %184 {approx = true} : vector<8x1xf32> -> vector<8x1xf32>
      %186 = vector.broadcast %185 : vector<8x1xf32> to vector<8x8xf32>
      %187 = arith.mulf %182, %186 : vector<8x8xf32>
      %188 = tpu.concatenate %166, %173, %180, %187 in 1 : vector<8x8xf32>, vector<8x8xf32>, vector<8x8xf32>, vector<8x8xf32> -> vector<8x32xf32>
      %c0_123 = arith.constant 0 : index
      %c0_124 = arith.constant 0 : index
      %c0_125 = arith.constant 0 : index
      %189 = vector.load %arg5[%c0_123, %c0_124, %c0_125] : memref<1x8x32xf32, #tpu.memory_space<vmem>>, vector<1x8x32xf32>
      %190 = vector.shape_cast %189 : vector<1x8x32xf32> to vector<8x32xf32>
      %191 = vector.shape_cast %188 : vector<8x32xf32> to vector<1x8x32xf32>
      tpu.vector_store %arg5[%c0_123, %c0_124, %c0_125], %191 {strides = array<i32>} : memref<1x8x32xf32, #tpu.memory_space<vmem>>, vector<1x8x32xf32>,
    } else {
    }
    return
  }
  func.func @transform_0(%arg0: i32, %arg1: i32) -> (i32, i32, i32) {
    %c0_i32 = arith.constant 0 : i32
    %c0_i32_0 = arith.constant 0 : i32
    %c0_i32_1 = arith.constant 0 : i32
    return %arg0, %c0_i32, %c0_i32_0 : i32, i32, i32
  }
  func.func @transform_1(%arg0: i32, %arg1: i32) -> (i32, i32, i32) {
    %c0_i32 = arith.constant 0 : i32
    %c0_i32_0 = arith.constant 0 : i32
    return %arg0, %arg1, %c0_i32 : i32, i32, i32
  }
  func.func @transform_2(%arg0: i32, %arg1: i32) -> (i32, i32, i32) {
    %c0_i32 = arith.constant 0 : i32
    %c0_i32_0 = arith.constant 0 : i32
    return %arg0, %arg1, %c0_i32 : i32, i32, i32
  }
  func.func @transform_3(%arg0: i32, %arg1: i32) -> (i32, i32, i32) {
    %c0_i32 = arith.constant 0 : i32
    %c0_i32_0 = arith.constant 0 : i32
    %c0_i32_1 = arith.constant 0 : i32
    return %arg0, %c0_i32, %c0_i32_0 : i32, i32, i32
  }
}

</mosaic_0001>

<llo_original>
// kernel: attention_forward.5
$region0: #{attention_forward.5}
  #allocation0 [shape = 'u32[]', space=smem, size = 0x4, offset = 0x4, fixed_abs, tag = 'smem constant byte address 0x4 - core index']
  #allocation1 [shape = 'u32[144,128]{1,0:T(1,128)}', space=vmem, size = 0x12000, scoped, tag = 'internal scratch']
  #allocation2 [shape = 'f32[16,32]{1,0:T(8,128)}', space=vmem, size = 0x2000, scoped, tag = 'scratch operand']
  %s0 = inlined_call_operand.vmem [shape: f32[16,32], index: 0, kind: input, shape index: {}]
  %s1 = inlined_call_operand.vmem [shape: f32[32,32], index: 1, kind: input, shape index: {}]
  %s2 = inlined_call_operand.vmem [shape: f32[1,32], index: 2, kind: input, shape index: {}]
  %s3 = inlined_call_operand.hbm [shape: f32[16,32], index: 3, kind: output, shape index: {}]
  %s4 = sld [smem:[#allocation0]]
  $region30: #{attention_forward.5} parent=0
    _
  %s6 = ssub.s32 1, %s4
  %s7 = scalar_select 0, %s6, %s4
  $region1: #{attention_forward.5} parent=0
    #allocation3 [shape = 'u8[8192]{0}', space=vmem, size = 0x2000, scoped, tag = 'output window, operand 0, single buffered']
    #allocation4 [shape = 's32[1]{0}', space=sflag, size = 0x4, scoped, tag = 'scoped memory for attention_forward.5']
    %8 = vsyncpa [#allocation4], 0
    // Predicated region
    $region2: #{attention_forward.5} parent=1 // pred_check
      _
    $region3: #{attention_forward.5} parent=1 // pred_check_branch
      %10 = sbr.rel (0) target = $region5
    $region4: #{attention_forward.5} parent=1 // pred_region
      _
    $region5: #{attention_forward.5} parent=1 // pred_fallthru
      _
    // Predicated region
    $region6: #{attention_forward.5} parent=1 // pred_check
      _
    $region7: #{attention_forward.5} parent=1 // pred_check_branch
      %12 = sbr.rel (0) target = $region9
    $region8: #{attention_forward.5} parent=1 // pred_region
      _
    $region9: #{attention_forward.5} parent=1 // pred_fallthru
      _
    // Predicated region
    $region10: #{attention_forward.5} parent=1 // pred_check
      _
    $region11: #{attention_forward.5} parent=1 // pred_check_branch
      %14 = sbr.rel (0) target = $region13
    $region12: #{attention_forward.5} parent=1 // pred_region
      _
    $region13: #{attention_forward.5} parent=1 // pred_fallthru
      _
    %p15 = scmp.eq.s32.totalorder 0, 0
    // Predicated region
    $region14: #{attention_forward.5} parent=1 // pred_check
      %p16 = pneg %p15
    $region15: #{attention_forward.5} parent=1 // pred_check_branch
      %18 = sbr.rel (%p16) target = $region17
    $region16: #{attention_forward.5} parent=1 // pred_region
      %vm19 = vcmask 261120
      %20 = vst.msk [vmem:[#allocation2] sm:$0xff] %vm19, 0.0
      %21 = vst.msk [vmem:[#allocation2 + $0x8] sm:$0xff] %vm19, 0.0
    $region17: #{attention_forward.5} parent=1 // pred_fallthru
      _
    %v22 = vld [vmem:[#allocation2] sm:$0xff]
    %v23 = vld [vmem:[#allocation2 + $0x8] sm:$0xff]
    %v24 = vld [vmem:[%s0] sm:$0xff]
    %v25 = vld [vmem:[%s0 + $0x8] sm:$0xff]
    %v26 = vld [vmem:[%s1] sm:$0xff]
    %v27 = vld [vmem:[%s1 + $0x8] sm:$0xff]
    %v28 = vld [vmem:[%s1 + $0x10] sm:$0xff]
    %v29 = vld [vmem:[%s1 + $0x18] sm:$0xff]
    %vm30 = vcmask 261120
    %v32 = vsel %vm30, %v24, 0
    %v35 = vsel %vm30, %v25, 0
    %37 = vmatprep.subr.mxu0 0.0
    %38 = vmatpush1.msra.mxu0 %v26
    %39 = vmatprep.subr.mxu0 0.0
    %40 = vmatpush1.msra.mxu0 %v27
    %41 = vmatprep.subr.mxu0 0.0
    %42 = vmatpush1.msra.mxu0 %v28
    %43 = vmatprep.subr.mxu0 0.0
    %44 = vmatpush1.msra.mxu0 %v29
    %45 = vmatprep.subr.mxu0 0.0
    %46 = vmatpush1.msra.mxu0 0.0
    %47 = vmatprep.subr.mxu0 0.0
    %48 = vmatpush1.msra.mxu0 0.0
    %49 = vmatprep.subr.mxu0 0.0
    %50 = vmatpush1.msra.mxu0 0.0
    %51 = vmatprep.subr.mxu0 0.0
    %52 = vmatpush1.msra.mxu0 0.0
    %53 = vmatprep.subr.mxu0 0.0
    %54 = vmatpush1.msra.mxu0 0.0
    %55 = vmatprep.subr.mxu0 0.0
    %56 = vmatpush1.msra.mxu0 0.0
    %57 = vmatprep.subr.mxu0 0.0
    %58 = vmatpush1.msra.mxu0 0.0
    %59 = vmatprep.subr.mxu0 0.0
    %60 = vmatpush1.msra.mxu0 0.0
    %61 = vmatprep.subr.mxu0 0.0
    %62 = vmatpush1.msra.mxu0 0.0
    %63 = vmatprep.subr.mxu0 0.0
    %64 = vmatpush1.msra.mxu0 0.0
    %65 = vmatprep.subr.mxu0 0.0
    %66 = vmatpush1.msra.mxu0 0.0
    %67 = vmatprep.subr.mxu0 0.0
    %68 = vmatpush1.msra.mxu0 0.0
    %69 = vmatprep.subr.mxu0 0.0
    %70 = vmatpush1.msra.mxu0 0.0
    %71 = vmatprep.subr.mxu0 0.0
    %72 = vmatpush1.msra.mxu0 0.0
    %73 = vmatprep.subr.mxu0 0.0
    %74 = vmatpush1.msra.mxu0 0.0
    %75 = vmatprep.subr.mxu0 0.0
    %76 = vmatpush1.msra.mxu0 0.0
    %77 = vmatprep.subr.mxu0 0.0
    %78 = vmatpush1.msra.mxu0 0.0
    %79 = vmatprep.subr.mxu0 0.0
    %80 = vmatpush1.msra.mxu0 0.0
    %81 = vmatprep.subr.mxu0 0.0
    %82 = vmatpush1.msra.mxu0 0.0
    %83 = vmatprep.subr.mxu0 0.0
    %84 = vmatpush1.msra.mxu0 0.0
    %85 = vmatprep.subr.mxu0 0.0
    %86 = vmatpush1.msra.mxu0 0.0
    %87 = vmatprep.subr.mxu0 0.0
    %88 = vmatpush1.msra.mxu0 0.0
    %89 = vmatprep.subr.mxu0 0.0
    %90 = vmatpush1.msra.mxu0 0.0
    %91 = vmatprep.subr.mxu0 0.0
    %92 = vmatpush1.msra.mxu0 0.0
    %93 = vmatprep.subr.mxu0 0.0
    %94 = vmatpush1.msra.mxu0 0.0
    %95 = vmatprep.subr.mxu0 0.0
    %96 = vmatpush1.msra.mxu0 0.0
    %97 = vmatprep.subr.mxu0 0.0
    %98 = vmatpush1.msra.mxu0 0.0
    %99 = vmatprep.subr.mxu0 0.0
    %100 = vmatpush1.msra.mxu0 0.0
    %101 = vmatprep.mubr.f32.mxu0 0.0
    %102 = vmatmul.mubr.f32.gmra.mrb[0].mxu0 %v32
    %v103 = vpop.f32.mrb[0].mxu0
    %v104 = vadd.f32 0.0, %v103
    %v105 = vpop.f32.mrb[0].mxu0
    %106 = vmatprep.mubr.f32.mxu0 0.0
    %107 = vmatmul.mubr.f32.gmra.mrb[0].mxu0 %v35
    %v108 = vpop.f32.mrb[0].mxu0
    %v109 = vadd.f32 0.0, %v108
    %v110 = vpop.f32.mrb[0].mxu0
    %111 = vdwg.mxu0
    %v112 = vadd.f32 %v22, %v104
    %v113 = vadd.f32 %v23, %v109
    %114 = vst.msk [vmem:[#allocation2] sm:$0xff] %vm30, %v112
    %115 = vst.msk [vmem:[#allocation2 + $0x8] sm:$0xff] %vm30, %v113
    // Predicated region
    $region18: #{attention_forward.5} parent=1 // pred_check
      %p116 = pneg %p15
    $region19: #{attention_forward.5} parent=1 // pred_check_branch
      %118 = sbr.rel (%p116) target = $region21
    $region20: #{attention_forward.5} parent=1 // pred_region
      %v119 = vld [vmem:[#allocation2] sm:$0xff]
      %v120 = vld [vmem:[#allocation2 + $0x8] sm:$0xff]
      %v121 = vld [vmem:[%s2] sm:$0x1]
      %v123 = vlaneseq
      %v124 = vshrl.u32 %v123, 7
      %v125 = vsub.s32 0, %v124
      %v126 = vrot.slane %v121, %v125
      %v128 = vadd.f32 %v119, %v126
      %v129 = vadd.f32 %v120, %v126
      %130 = vst.msk [vmem:[#allocation3] sm:$0xff] %vm30, %v128
      %131 = vst.msk [vmem:[#allocation3 + $0x8] sm:$0xff] %vm30, %v129
    $region21: #{attention_forward.5} parent=1 // pred_fallthru
      _
    // Predicated region
    $region22: #{attention_forward.5} parent=1 // pred_check
      _
    $region23: #{attention_forward.5} parent=1 // pred_check_branch
      %133 = sbr.rel (0) target = $region25
    $region24: #{attention_forward.5} parent=1 // pred_region
      %s135 = ssub.s32 256, 256
      %136 = vsyncadd [#allocation4], %s135
      %s137 = sshll.u32 [#allocation3], 4
      %s138 = int_to_ptr.vmem [resolvable:$true] %s137
      %143 = dma.vmem_to_hbm [thread:$0]  %s138, 256, %s3, [#allocation4], 128, 128, 8
    $region25: #{attention_forward.5} parent=1 // pred_fallthru
      _
    // Predicated region
    $region26: #{attention_forward.5} parent=1 // pred_check
      _
    $region27: #{attention_forward.5} parent=1 // pred_check_branch
      %145 = sbr.rel (0) target = $region29
    $region28: #{attention_forward.5} parent=1 // pred_region
      %146 = dma.done [#allocation4], 256
    $region29: #{attention_forward.5} parent=1 // pred_fallthru
      _
    %147 = vsyncpa [#allocation4], 1

// kernel: attention_forward.3
$region0: #{attention_forward.3}
  #allocation0 [shape = 'u32[]', space=smem, size = 0x4, offset = 0x4, fixed_abs, tag = 'smem constant byte address 0x4 - core index']
  #allocation1 [shape = 'u32[144,128]{1,0:T(1,128)}', space=vmem, size = 0x12000, scoped, tag = 'internal scratch']
  #allocation2 [shape = 'f32[16,32]{1,0:T(8,128)}', space=vmem, size = 0x2000, scoped, tag = 'scratch operand']
  #allocation3 [shape = 'f32[16,32]{1,0:T(8,128)}', space=vmem, size = 0x2000, scoped, tag = 'scratch operand']
  #allocation4 [shape = 'f32[16,32]{1,0:T(8,128)}', space=vmem, size = 0x2000, scoped, tag = 'scratch operand']
  %s0 = inlined_call_operand.hbm [shape: f32[16,32], index: 0, kind: input, shape index: {}]
  %s1 = inlined_call_operand.vmem [shape: f32[32,32], index: 1, kind: input, shape index: {}]
  %s2 = inlined_call_operand.hbm [shape: f32[32,32], index: 2, kind: input, shape index: {}]
  %s3 = inlined_call_operand.hbm [shape: f32[32,32], index: 3, kind: input, shape index: {}]
  %s4 = inlined_call_operand.vmem [shape: f32[1,32], index: 4, kind: input, shape index: {}]
  %s5 = inlined_call_operand.vmem [shape: f32[1,32], index: 5, kind: input, shape index: {}]
  %s6 = inlined_call_operand.vmem [shape: f32[16,32], index: 6, kind: output, shape index: {0}]
  %s7 = inlined_call_operand.vmem [shape: f32[16,32], index: 7, kind: output, shape index: {1}]
  %s8 = inlined_call_operand.vmem [shape: f32[16,32], index: 8, kind: output, shape index: {2}]
  %9 = xla_tuple %s6, %s7, %s8
  %s10 = sld [smem:[#allocation0]]
  $region70: #{attention_forward.3} parent=0
    _
  %s12 = ssub.s32 1, %s10
  %s13 = scalar_select 0, %s12, %s10
  $region1: #{attention_forward.3} parent=0
    #allocation5 [shape = 'u8[8192]{0}', space=vmem, size = 0x2000, scoped, tag = 'input window, operand 0, single buffered']
    #allocation6 [shape = 's32[1]{0}', space=sflag, size = 0x4, scoped, tag = 'scoped memory for attention_forward.3']
    #allocation7 [shape = 'u8[16384]{0}', space=vmem, size = 0x4000, scoped, tag = 'input window, operand 2, single buffered']
    #allocation8 [shape = 's32[1]{0}', space=sflag, size = 0x4, scoped, tag = 'scoped memory for attention_forward.3']
    #allocation9 [shape = 'u8[16384]{0}', space=vmem, size = 0x4000, scoped, tag = 'input window, operand 3, single buffered']
    %14 = vsyncpa [#allocation6], 0
    %15 = vsyncpa [#allocation8], 0
    // Predicated region
    $region2: #{attention_forward.3} parent=1 // pred_check
      _
    $region3: #{attention_forward.3} parent=1 // pred_check_branch
      %17 = sbr.rel (0) target = $region5
    $region4: #{attention_forward.3} parent=1 // pred_region
      %s19 = ssub.s32 256, 256
      %20 = vsyncadd [#allocation6], %s19
      %s21 = sshll.u32 [#allocation5], 4
      %s22 = int_to_ptr.vmem [resolvable:$true] %s21
      %27 = dma.hbm_to_vmem [thread:$0]  %s0, 256, %s22, [#allocation6], 128, 128, 8
    $region5: #{attention_forward.3} parent=1 // pred_fallthru
      _
    // Predicated region
    $region6: #{attention_forward.3} parent=1 // pred_check
      _
    $region7: #{attention_forward.3} parent=1 // pred_check_branch
      %29 = sbr.rel (0) target = $region9
    $region8: #{attention_forward.3} parent=1 // pred_region
      _
    $region9: #{attention_forward.3} parent=1 // pred_fallthru
      _
    // Predicated region
    $region10: #{attention_forward.3} parent=1 // pred_check
      _
    $region11: #{attention_forward.3} parent=1 // pred_check_branch
      %31 = sbr.rel (0) target = $region13
    $region12: #{attention_forward.3} parent=1 // pred_region
      %s33 = ssub.s32 512, 512
      %34 = vsyncadd [#allocation8], %s33
      %s35 = sshll.u32 [#allocation7], 4
      %s36 = int_to_ptr.vmem [resolvable:$true] %s35
      %41 = dma.hbm_to_vmem [thread:$0]  %s2, 512, %s36, [#allocation8], 128, 128, 8
    $region13: #{attention_forward.3} parent=1 // pred_fallthru
      _
    // Predicated region
    $region14: #{attention_forward.3} parent=1 // pred_check
      _
    $region15: #{attention_forward.3} parent=1 // pred_check_branch
      %43 = sbr.rel (0) target = $region17
    $region16: #{attention_forward.3} parent=1 // pred_region
      %s45 = ssub.s32 512, 512
      %46 = vsyncadd [#allocation8], %s45
      %s47 = sshll.u32 [#allocation9], 4
      %s48 = int_to_ptr.vmem [resolvable:$true] %s47
      %53 = dma.hbm_to_vmem [thread:$0]  %s3, 512, %s48, [#allocation8], 128, 128, 8
    $region17: #{attention_forward.3} parent=1 // pred_fallthru
      _
    // Predicated region
    $region18: #{attention_forward.3} parent=1 // pred_check
      _
    $region19: #{attention_forward.3} parent=1 // pred_check_branch
      %55 = sbr.rel (0) target = $region21
    $region20: #{attention_forward.3} parent=1 // pred_region
      _
    $region21: #{attention_forward.3} parent=1 // pred_fallthru
      _
    // Predicated region
    $region22: #{attention_forward.3} parent=1 // pred_check
      _
    $region23: #{attention_forward.3} parent=1 // pred_check_branch
      %57 = sbr.rel (0) target = $region25
    $region24: #{attention_forward.3} parent=1 // pred_region
      _
    $region25: #{attention_forward.3} parent=1 // pred_fallthru
      _
    // Predicated region
    $region26: #{attention_forward.3} parent=1 // pred_check
      _
    $region27: #{attention_forward.3} parent=1 // pred_check_branch
      %59 = sbr.rel (0) target = $region29
    $region28: #{attention_forward.3} parent=1 // pred_region
      %60 = dma.done [#allocation6], 256
    $region29: #{attention_forward.3} parent=1 // pred_fallthru
      _
    // Predicated region
    $region30: #{attention_forward.3} parent=1 // pred_check
      _
    $region31: #{attention_forward.3} parent=1 // pred_check_branch
      %62 = sbr.rel (0) target = $region33
    $region32: #{attention_forward.3} parent=1 // pred_region
      %63 = dma.done [#allocation8], 512
    $region33: #{attention_forward.3} parent=1 // pred_fallthru
      _
    // Predicated region
    $region34: #{attention_forward.3} parent=1 // pred_check
      _
    $region35: #{attention_forward.3} parent=1 // pred_check_branch
      %65 = sbr.rel (0) target = $region37
    $region36: #{attention_forward.3} parent=1 // pred_region
      %66 = dma.done [#allocation8], 512
    $region37: #{attention_forward.3} parent=1 // pred_fallthru
      _
    %p67 = scmp.eq.s32.totalorder 0, 0
    // Predicated region
    $region38: #{attention_forward.3} parent=1 // pred_check
      %p68 = pneg %p67
    $region39: #{attention_forward.3} parent=1 // pred_check_branch
      %70 = sbr.rel (%p68) target = $region41
    $region40: #{attention_forward.3} parent=1 // pred_region
      %vm71 = vcmask 261120
      %72 = vst.msk [vmem:[#allocation2] sm:$0xff] %vm71, 0.0
      %73 = vst.msk [vmem:[#allocation2 + $0x8] sm:$0xff] %vm71, 0.0
      %74 = vst.msk [vmem:[#allocation3] sm:$0xff] %vm71, 0.0
      %75 = vst.msk [vmem:[#allocation3 + $0x8] sm:$0xff] %vm71, 0.0
      %76 = vst.msk [vmem:[#allocation4] sm:$0xff] %vm71, 0.0
      %77 = vst.msk [vmem:[#allocation4 + $0x8] sm:$0xff] %vm71, 0.0
    $region41: #{attention_forward.3} parent=1 // pred_fallthru
      _
    %v78 = vld [vmem:[#allocation5] sm:$0xff]
    %v79 = vld [vmem:[#allocation5 + $0x8] sm:$0xff]
    %v80 = vld [vmem:[#allocation2] sm:$0xff]
    %v81 = vld [vmem:[#allocation2 + $0x8] sm:$0xff]
    %v82 = vld [vmem:[%s1] sm:$0xff]
    %v83 = vld [vmem:[%s1 + $0x8] sm:$0xff]
    %v84 = vld [vmem:[%s1 + $0x10] sm:$0xff]
    %v85 = vld [vmem:[%s1 + $0x18] sm:$0xff]
    %vm86 = vcmask 261120
    %v88 = vsel %vm86, %v78, 0
    %v91 = vsel %vm86, %v79, 0
    %93 = vmatprep.subr.mxu0 0.0
    %94 = vmatpush1.msra.mxu0 %v82
    %95 = vmatprep.subr.mxu0 0.0
    %96 = vmatpush1.msra.mxu0 %v83
    %97 = vmatprep.subr.mxu0 0.0
    %98 = vmatpush1.msra.mxu0 %v84
    %99 = vmatprep.subr.mxu0 0.0
    %100 = vmatpush1.msra.mxu0 %v85
    %101 = vmatprep.subr.mxu0 0.0
    %102 = vmatpush1.msra.mxu0 0.0
    %103 = vmatprep.subr.mxu0 0.0
    %104 = vmatpush1.msra.mxu0 0.0
    %105 = vmatprep.subr.mxu0 0.0
    %106 = vmatpush1.msra.mxu0 0.0
    %107 = vmatprep.subr.mxu0 0.0
    %108 = vmatpush1.msra.mxu0 0.0
    %109 = vmatprep.subr.mxu0 0.0
    %110 = vmatpush1.msra.mxu0 0.0
    %111 = vmatprep.subr.mxu0 0.0
    %112 = vmatpush1.msra.mxu0 0.0
    %113 = vmatprep.subr.mxu0 0.0
    %114 = vmatpush1.msra.mxu0 0.0
    %115 = vmatprep.subr.mxu0 0.0
    %116 = vmatpush1.msra.mxu0 0.0
    %117 = vmatprep.subr.mxu0 0.0
    %118 = vmatpush1.msra.mxu0 0.0
    %119 = vmatprep.subr.mxu0 0.0
    %120 = vmatpush1.msra.mxu0 0.0
    %121 = vmatprep.subr.mxu0 0.0
    %122 = vmatpush1.msra.mxu0 0.0
    %123 = vmatprep.subr.mxu0 0.0
    %124 = vmatpush1.msra.mxu0 0.0
    %125 = vmatprep.subr.mxu0 0.0
    %126 = vmatpush1.msra.mxu0 0.0
    %127 = vmatprep.subr.mxu0 0.0
    %128 = vmatpush1.msra.mxu0 0.0
    %129 = vmatprep.subr.mxu0 0.0
    %130 = vmatpush1.msra.mxu0 0.0
    %131 = vmatprep.subr.mxu0 0.0
    %132 = vmatpush1.msra.mxu0 0.0
    %133 = vmatprep.subr.mxu0 0.0
    %134 = vmatpush1.msra.mxu0 0.0
    %135 = vmatprep.subr.mxu0 0.0
    %136 = vmatpush1.msra.mxu0 0.0
    %137 = vmatprep.subr.mxu0 0.0
    %138 = vmatpush1.msra.mxu0 0.0
    %139 = vmatprep.subr.mxu0 0.0
    %140 = vmatpush1.msra.mxu0 0.0
    %141 = vmatprep.subr.mxu0 0.0
    %142 = vmatpush1.msra.mxu0 0.0
    %143 = vmatprep.subr.mxu0 0.0
    %144 = vmatpush1.msra.mxu0 0.0
    %145 = vmatprep.subr.mxu0 0.0
    %146 = vmatpush1.msra.mxu0 0.0
    %147 = vmatprep.subr.mxu0 0.0
    %148 = vmatpush1.msra.mxu0 0.0
    %149 = vmatprep.subr.mxu0 0.0
    %150 = vmatpush1.msra.mxu0 0.0
    %151 = vmatprep.subr.mxu0 0.0
    %152 = vmatpush1.msra.mxu0 0.0
    %153 = vmatprep.subr.mxu0 0.0
    %154 = vmatpush1.msra.mxu0 0.0
    %155 = vmatprep.subr.mxu0 0.0
    %156 = vmatpush1.msra.mxu0 0.0
    %157 = vmatprep.mubr.f32.mxu0 0.0
    %158 = vmatmul.mubr.f32.gmra.mrb[0].mxu0 %v88
    %v159 = vpop.f32.mrb[0].mxu0
    %v160 = vadd.f32 0.0, %v159
    %v161 = vpop.f32.mrb[0].mxu0
    %162 = vmatprep.mubr.f32.mxu0 0.0
    %163 = vmatmul.mubr.f32.gmra.mrb[0].mxu0 %v91
    %v164 = vpop.f32.mrb[0].mxu0
    %v165 = vadd.f32 0.0, %v164
    %v166 = vpop.f32.mrb[0].mxu0
    %167 = vdwg.mxu0
    %v168 = vadd.f32 %v80, %v160
    %v169 = vadd.f32 %v81, %v165
    %170 = vst.msk [vmem:[#allocation2] sm:$0xff] %vm86, %v168
    %171 = vst.msk [vmem:[#allocation2 + $0x8] sm:$0xff] %vm86, %v169
    %v172 = vld [vmem:[#allocation3] sm:$0xff]
    %v173 = vld [vmem:[#allocation3 + $0x8] sm:$0xff]
    %v174 = vld [vmem:[#allocation7] sm:$0xff]
    %v175 = vld [vmem:[#allocation7 + $0x8] sm:$0xff]
    %v176 = vld [vmem:[#allocation7 + $0x10] sm:$0xff]
    %v177 = vld [vmem:[#allocation7 + $0x18] sm:$0xff]
    %178 = vmatprep.subr.mxu0 0.0
    %179 = vmatpush1.msra.mxu0 %v174
    %180 = vmatprep.subr.mxu0 0.0
    %181 = vmatpush1.msra.mxu0 %v175
    %182 = vmatprep.subr.mxu0 0.0
    %183 = vmatpush1.msra.mxu0 %v176
    %184 = vmatprep.subr.mxu0 0.0
    %185 = vmatpush1.msra.mxu0 %v177
    %186 = vmatprep.subr.mxu0 0.0
    %187 = vmatpush1.msra.mxu0 0.0
    %188 = vmatprep.subr.mxu0 0.0
    %189 = vmatpush1.msra.mxu0 0.0
    %190 = vmatprep.subr.mxu0 0.0
    %191 = vmatpush1.msra.mxu0 0.0
    %192 = vmatprep.subr.mxu0 0.0
    %193 = vmatpush1.msra.mxu0 0.0
    %194 = vmatprep.subr.mxu0 0.0
    %195 = vmatpush1.msra.mxu0 0.0
    %196 = vmatprep.subr.mxu0 0.0
    %197 = vmatpush1.msra.mxu0 0.0
    %198 = vmatprep.subr.mxu0 0.0
    %199 = vmatpush1.msra.mxu0 0.0
    %200 = vmatprep.subr.mxu0 0.0
    %201 = vmatpush1.msra.mxu0 0.0
    %202 = vmatprep.subr.mxu0 0.0
    %203 = vmatpush1.msra.mxu0 0.0
    %204 = vmatprep.subr.mxu0 0.0
    %205 = vmatpush1.msra.mxu0 0.0
    %206 = vmatprep.subr.mxu0 0.0
    %207 = vmatpush1.msra.mxu0 0.0
    %208 = vmatprep.subr.mxu0 0.0
    %209 = vmatpush1.msra.mxu0 0.0
    %210 = vmatprep.subr.mxu0 0.0
    %211 = vmatpush1.msra.mxu0 0.0
    %212 = vmatprep.subr.mxu0 0.0
    %213 = vmatpush1.msra.mxu0 0.0
    %214 = vmatprep.subr.mxu0 0.0
    %215 = vmatpush1.msra.mxu0 0.0
    %216 = vmatprep.subr.mxu0 0.0
    %217 = vmatpush1.msra.mxu0 0.0
    %218 = vmatprep.subr.mxu0 0.0
    %219 = vmatpush1.msra.mxu0 0.0
    %220 = vmatprep.subr.mxu0 0.0
    %221 = vmatpush1.msra.mxu0 0.0
    %222 = vmatprep.subr.mxu0 0.0
    %223 = vmatpush1.msra.mxu0 0.0
    %224 = vmatprep.subr.mxu0 0.0
    %225 = vmatpush1.msra.mxu0 0.0
    %226 = vmatprep.subr.mxu0 0.0
    %227 = vmatpush1.msra.mxu0 0.0
    %228 = vmatprep.subr.mxu0 0.0
    %229 = vmatpush1.msra.mxu0 0.0
    %230 = vmatprep.subr.mxu0 0.0
    %231 = vmatpush1.msra.mxu0 0.0
    %232 = vmatprep.subr.mxu0 0.0
    %233 = vmatpush1.msra.mxu0 0.0
    %234 = vmatprep.subr.mxu0 0.0
    %235 = vmatpush1.msra.mxu0 0.0
    %236 = vmatprep.subr.mxu0 0.0
    %237 = vmatpush1.msra.mxu0 0.0
    %238 = vmatprep.subr.mxu0 0.0
    %239 = vmatpush1.msra.mxu0 0.0
    %240 = vmatprep.subr.mxu0 0.0
    %241 = vmatpush1.msra.mxu0 0.0
    %242 = vmatprep.mubr.f32.mxu0 0.0
    %243 = vmatmul.mubr.f32.gmra.mrb[0].mxu0 %v88
    %v244 = vpop.f32.mrb[0].mxu0
    %v245 = vadd.f32 0.0, %v244
    %v246 = vpop.f32.mrb[0].mxu0
    %247 = vmatprep.mubr.f32.mxu0 0.0
    %248 = vmatmul.mubr.f32.gmra.mrb[0].mxu0 %v91
    %v249 = vpop.f32.mrb[0].mxu0
    %v250 = vadd.f32 0.0, %v249
    %v251 = vpop.f32.mrb[0].mxu0
    %252 = vdwg.mxu0
    %v253 = vadd.f32 %v172, %v245
    %v254 = vadd.f32 %v173, %v250
    %255 = vst.msk [vmem:[#allocation3] sm:$0xff] %vm86, %v253
    %256 = vst.msk [vmem:[#allocation3 + $0x8] sm:$0xff] %vm86, %v254
    %v257 = vld [vmem:[#allocation4] sm:$0xff]
    %v258 = vld [vmem:[#allocation4 + $0x8] sm:$0xff]
    %v259 = vld [vmem:[#allocation9] sm:$0xff]
    %v260 = vld [vmem:[#allocation9 + $0x8] sm:$0xff]
    %v261 = vld [vmem:[#allocation9 + $0x10] sm:$0xff]
    %v262 = vld [vmem:[#allocation9 + $0x18] sm:$0xff]
    %263 = vmatprep.subr.mxu0 0.0
    %264 = vmatpush1.msra.mxu0 %v259
    %265 = vmatprep.subr.mxu0 0.0
    %266 = vmatpush1.msra.mxu0 %v260
    %267 = vmatprep.subr.mxu0 0.0
    %268 = vmatpush1.msra.mxu0 %v261
    %269 = vmatprep.subr.mxu0 0.0
    %270 = vmatpush1.msra.mxu0 %v262
    %271 = vmatprep.subr.mxu0 0.0
    %272 = vmatpush1.msra.mxu0 0.0
    %273 = vmatprep.subr.mxu0 0.0
    %274 = vmatpush1.msra.mxu0 0.0
    %275 = vmatprep.subr.mxu0 0.0
    %276 = vmatpush1.msra.mxu0 0.0
    %277 = vmatprep.subr.mxu0 0.0
    %278 = vmatpush1.msra.mxu0 0.0
    %279 = vmatprep.subr.mxu0 0.0
    %280 = vmatpush1.msra.mxu0 0.0
    %281 = vmatprep.subr.mxu0 0.0
    %282 = vmatpush1.msra.mxu0 0.0
    %283 = vmatprep.subr.mxu0 0.0
    %284 = vmatpush1.msra.mxu0 0.0
    %285 = vmatprep.subr.mxu0 0.0
    %286 = vmatpush1.msra.mxu0 0.0
    %287 = vmatprep.subr.mxu0 0.0
    %288 = vmatpush1.msra.mxu0 0.0
    %289 = vmatprep.subr.mxu0 0.0
    %290 = vmatpush1.msra.mxu0 0.0
    %291 = vmatprep.subr.mxu0 0.0
    %292 = vmatpush1.msra.mxu0 0.0
    %293 = vmatprep.subr.mxu0 0.0
    %294 = vmatpush1.msra.mxu0 0.0
    %295 = vmatprep.subr.mxu0 0.0
    %296 = vmatpush1.msra.mxu0 0.0
    %297 = vmatprep.subr.mxu0 0.0
    %298 = vmatpush1.msra.mxu0 0.0
    %299 = vmatprep.subr.mxu0 0.0
    %300 = vmatpush1.msra.mxu0 0.0
    %301 = vmatprep.subr.mxu0 0.0
    %302 = vmatpush1.msra.mxu0 0.0
    %303 = vmatprep.subr.mxu0 0.0
    %304 = vmatpush1.msra.mxu0 0.0
    %305 = vmatprep.subr.mxu0 0.0
    %306 = vmatpush1.msra.mxu0 0.0
    %307 = vmatprep.subr.mxu0 0.0
    %308 = vmatpush1.msra.mxu0 0.0
    %309 = vmatprep.subr.mxu0 0.0
    %310 = vmatpush1.msra.mxu0 0.0
    %311 = vmatprep.subr.mxu0 0.0
    %312 = vmatpush1.msra.mxu0 0.0
    %313 = vmatprep.subr.mxu0 0.0
    %314 = vmatpush1.msra.mxu0 0.0
    %315 = vmatprep.subr.mxu0 0.0
    %316 = vmatpush1.msra.mxu0 0.0
    %317 = vmatprep.subr.mxu0 0.0
    %318 = vmatpush1.msra.mxu0 0.0
    %319 = vmatprep.subr.mxu0 0.0
    %320 = vmatpush1.msra.mxu0 0.0
    %321 = vmatprep.subr.mxu0 0.0
    %322 = vmatpush1.msra.mxu0 0.0
    %323 = vmatprep.subr.mxu0 0.0
    %324 = vmatpush1.msra.mxu0 0.0
    %325 = vmatprep.subr.mxu0 0.0
    %326 = vmatpush1.msra.mxu0 0.0
    %327 = vmatprep.mubr.f32.mxu0 0.0
    %328 = vmatmul.mubr.f32.gmra.mrb[0].mxu0 %v88
    %v329 = vpop.f32.mrb[0].mxu0
    %v330 = vadd.f32 0.0, %v329
    %v331 = vpop.f32.mrb[0].mxu0
    %332 = vmatprep.mubr.f32.mxu0 0.0
    %333 = vmatmul.mubr.f32.gmra.mrb[0].mxu0 %v91
    %v334 = vpop.f32.mrb[0].mxu0
    %v335 = vadd.f32 0.0, %v334
    %v336 = vpop.f32.mrb[0].mxu0
    %337 = vdwg.mxu0
    %v338 = vadd.f32 %v257, %v330
    %v339 = vadd.f32 %v258, %v335
    %340 = vst.msk [vmem:[#allocation4] sm:$0xff] %vm86, %v338
    %341 = vst.msk [vmem:[#allocation4 + $0x8] sm:$0xff] %vm86, %v339
    // Predicated region
    $region42: #{attention_forward.3} parent=1 // pred_check
      %p342 = pneg %p67
    $region43: #{attention_forward.3} parent=1 // pred_check_branch
      %344 = sbr.rel (%p342) target = $region45
    $region44: #{attention_forward.3} parent=1 // pred_region
      %v345 = vld [vmem:[#allocation2] sm:$0xff]
      %v346 = vld [vmem:[#allocation2 + $0x8] sm:$0xff]
      %v347 = vld [vmem:[%s4] sm:$0x1]
      %v349 = vlaneseq
      %v350 = vshrl.u32 %v349, 7
      %v351 = vsub.s32 0, %v350
      %v352 = vrot.slane %v347, %v351
      %v354 = vadd.f32 %v345, %v352
      %v355 = vadd.f32 %v346, %v352
      %356 = vst.msk [vmem:[%s6] sm:$0xff] %vm86, %v354
      %357 = vst.msk [vmem:[%s6 + $0x8] sm:$0xff] %vm86, %v355
      %v358 = vld [vmem:[#allocation3] sm:$0xff]
      %v359 = vld [vmem:[#allocation3 + $0x8] sm:$0xff]
      %360 = vst.msk [vmem:[%s7] sm:$0xff] %vm86, %v358
      %361 = vst.msk [vmem:[%s7 + $0x8] sm:$0xff] %vm86, %v359
      %v362 = vld [vmem:[#allocation4] sm:$0xff]
      %v363 = vld [vmem:[#allocation4 + $0x8] sm:$0xff]
      %v364 = vld [vmem:[%s5] sm:$0x1]
      %v366 = vlaneseq
      %v367 = vshrl.u32 %v366, 7
      %v368 = vsub.s32 0, %v367
      %v369 = vrot.slane %v364, %v368
      %v371 = vadd.f32 %v362, %v369
      %v372 = vadd.f32 %v363, %v369
      %373 = vst.msk [vmem:[%s8] sm:$0xff] %vm86, %v371
      %374 = vst.msk [vmem:[%s8 + $0x8] sm:$0xff] %vm86, %v372
    $region45: #{attention_forward.3} parent=1 // pred_fallthru
      _
    // Predicated region
    $region46: #{attention_forward.3} parent=1 // pred_check
      _
    $region47: #{attention_forward.3} parent=1 // pred_check_branch
      %376 = sbr.rel (0) target = $region49
    $region48: #{attention_forward.3} parent=1 // pred_region
      _
    $region49: #{attention_forward.3} parent=1 // pred_fallthru
      _
    // Predicated region
    $region50: #{attention_forward.3} parent=1 // pred_check
      _
    $region51: #{attention_forward.3} parent=1 // pred_check_branch
      %378 = sbr.rel (0) target = $region53
    $region52: #{attention_forward.3} parent=1 // pred_region
      _
    $region53: #{attention_forward.3} parent=1 // pred_fallthru
      _
    // Predicated region
    $region54: #{attention_forward.3} parent=1 // pred_check
      _
    $region55: #{attention_forward.3} parent=1 // pred_check_branch
      %380 = sbr.rel (0) target = $region57
    $region56: #{attention_forward.3} parent=1 // pred_region
      _
    $region57: #{attention_forward.3} parent=1 // pred_fallthru
      _
    // Predicated region
    $region58: #{attention_forward.3} parent=1 // pred_check
      _
    $region59: #{attention_forward.3} parent=1 // pred_check_branch
      %382 = sbr.rel (0) target = $region61
    $region60: #{attention_forward.3} parent=1 // pred_region
      _
    $region61: #{attention_forward.3} parent=1 // pred_fallthru
      _
    // Predicated region
    $region62: #{attention_forward.3} parent=1 // pred_check
      _
    $region63: #{attention_forward.3} parent=1 // pred_check_branch
      %384 = sbr.rel (0) target = $region65
    $region64: #{attention_forward.3} parent=1 // pred_region
      _
    $region65: #{attention_forward.3} parent=1 // pred_fallthru
      _
    // Predicated region
    $region66: #{attention_forward.3} parent=1 // pred_check
      _
    $region67: #{attention_forward.3} parent=1 // pred_check_branch
      %386 = sbr.rel (0) target = $region69
    $region68: #{attention_forward.3} parent=1 // pred_region
      _
    $region69: #{attention_forward.3} parent=1 // pred_fallthru
      _
    %387 = vsyncpa [#allocation6], 1
    %388 = vsyncpa [#allocation8], 1

// kernel: attention_forward.4
$region0: #{attention_forward.4}
  #allocation0 [shape = 'u32[]', space=smem, size = 0x4, offset = 0x4, fixed_abs, tag = 'smem constant byte address 0x4 - core index']
  #allocation1 [shape = 'u32[144,128]{1,0:T(1,128)}', space=vmem, size = 0x12000, scoped, tag = 'internal scratch']
  #allocation2 [shape = 'f32[4,8,1]{2,1,0:T(8,128)}', space=vmem, size = 0x4000, scoped, tag = 'scratch operand']
  #allocation3 [shape = 'f32[4,8,1]{2,1,0:T(8,128)}', space=vmem, size = 0x4000, scoped, tag = 'scratch operand']
  #allocation4 [shape = 'f32[4,8,8]{2,1,0:T(8,128)}', space=vmem, size = 0x4000, scoped, tag = 'scratch operand']
  %s0 = inlined_call_operand.vmem [shape: f32[2,8,32], index: 0, kind: input, shape index: {}]
  %s1 = inlined_call_operand.vmem [shape: f32[2,8,32], index: 1, kind: input, shape index: {}]
  %s2 = inlined_call_operand.vmem [shape: f32[2,8,32], index: 2, kind: input, shape index: {}]
  %s3 = inlined_call_operand.vmem [shape: f32[2,8,32], index: 3, kind: output, shape index: {}]
  %s4 = sld [smem:[#allocation0]]
  $region53: #{attention_forward.4} parent=0
    _
  %s6 = ssub.s32 1, %s4
  %s7 = scalar_select 0, %s6, %s4
  loop: start=0, step=1, limit=4
  $region2: #{attention_forward.4} parent=0 // loop_pre_header
    _
  $region3: #{attention_forward.4} parent=0 // loop_header
    %s9 = sphi 0, %s13
    %p10 = scmp.ge.s32.totalorder %s9, 4
    %s16 = sphi 0, %s28
    %s17 = sphi 0, %s24
    %s18 = sphi 0, %s16
    %s19 = sphi 0, %s17
    %s20 = sphi 0, %s18
    %s21 = sphi 0, %s19
    %s31 = sphi 0, %s33
    %s34 = sphi 0, %s31
    %s35 = sphi 0, %s34
    %s51 = sphi 0, %s35
    %s59 = sphi 0, %s61
    %s62 = sphi 0, %s59
    %s63 = sphi 0, %s62
    %s79 = sphi 0, %s63
    %s87 = sphi 0, %s89
    %s90 = sphi 0, %s87
    %s91 = sphi 0, %s90
    %s107 = sphi 0, %s91
    %s113 = sphi 0, %s115
    %s116 = sphi 0, %s113
    %s117 = sphi 0, %s116
    %s133 = sphi 0, %s117
  $region4: #{attention_forward.4} parent=0 // loop_header_branch
    %12 = sbr.rel (%p10) target = $region8
  $region5: #{attention_forward.4} parent=0 // loop_body
    %s14 = ssub.s32 %s9, 1
    %s15 = ssub.s32 %s9, 2
    %s22 = sadd.s32 1, %s17
    %p23 = scmp.ge.s32.totalorder %s22, 1
    %s24 = scalar_select %p23, 0, %s22
    %s25 = sadd.s32 1, %s16
    %s26 = scalar_select %p23, %s25, %s16
    %p27 = scmp.ge.s32.totalorder %s26, 2
    %s28 = scalar_select %p27, 0, %s26
    %s29 = ssub.s32 %s16, %s28
    %p30 = scmp.eq.s32.totalorder %s29, 0
    %s32 = sadd.s32 %s31, 1
    %s33 = scalar_select %p30, %s31, %s32
    %p36 = pneg %p30
    %p37 = scmp.eq.s32.totalorder %s9, 1
    %p38 = por %p36, %p37
    %p39 = scmp.ne.s32.totalorder %s31, %s34
    %p40 = scmp.eq.s32.totalorder %s9, 0
    %p41 = por %p39, %p40
    %p42 = scmp.ne.s32.totalorder %s31, %s34
    %p43 = scmp.eq.s32.totalorder %s14, 1
    %p44 = por %p42, %p43
    %p45 = scmp.ne.s32.totalorder %s34, %s35
    %p46 = scmp.eq.s32.totalorder %s14, 0
    %p47 = por %p45, %p46
    %p48 = scmp.ne.s32.totalorder %s34, %s35
    %p49 = scmp.eq.s32.totalorder %s15, 1
    %p50 = por %p48, %p49
    %p52 = scmp.ne.s32.totalorder %s35, %s51
    %p53 = scmp.eq.s32.totalorder %s15, 0
    %p54 = por %p52, %p53
    %s55 = ssub.s32 %s16, %s28
    %s56 = ssub.s32 %s17, %s24
    %s57 = sor.u32 %s55, %s56
    %p58 = scmp.eq.s32.totalorder %s57, 0
    %s60 = sadd.s32 %s59, 1
    %s61 = scalar_select %p58, %s59, %s60
    %p64 = pneg %p58
    %p65 = scmp.eq.s32.totalorder %s9, 1
    %p66 = por %p64, %p65
    %p67 = scmp.ne.s32.totalorder %s59, %s62
    %p68 = scmp.eq.s32.totalorder %s9, 0
    %p69 = por %p67, %p68
    %p70 = scmp.ne.s32.totalorder %s59, %s62
    %p71 = scmp.eq.s32.totalorder %s14, 1
    %p72 = por %p70, %p71
    %p73 = scmp.ne.s32.totalorder %s62, %s63
    %p74 = scmp.eq.s32.totalorder %s14, 0
    %p75 = por %p73, %p74
    %p76 = scmp.ne.s32.totalorder %s62, %s63
    %p77 = scmp.eq.s32.totalorder %s15, 1
    %p78 = por %p76, %p77
    %p80 = scmp.ne.s32.totalorder %s63, %s79
    %p81 = scmp.eq.s32.totalorder %s15, 0
    %p82 = por %p80, %p81
    %s83 = ssub.s32 %s16, %s28
    %s84 = ssub.s32 %s17, %s24
    %s85 = sor.u32 %s83, %s84
    %p86 = scmp.eq.s32.totalorder %s85, 0
    %s88 = sadd.s32 %s87, 1
    %s89 = scalar_select %p86, %s87, %s88
    %p92 = pneg %p86
    %p93 = scmp.eq.s32.totalorder %s9, 1
    %p94 = por %p92, %p93
    %p95 = scmp.ne.s32.totalorder %s87, %s90
    %p96 = scmp.eq.s32.totalorder %s9, 0
    %p97 = por %p95, %p96
    %p98 = scmp.ne.s32.totalorder %s87, %s90
    %p99 = scmp.eq.s32.totalorder %s14, 1
    %p100 = por %p98, %p99
    %p101 = scmp.ne.s32.totalorder %s90, %s91
    %p102 = scmp.eq.s32.totalorder %s14, 0
    %p103 = por %p101, %p102
    %p104 = scmp.ne.s32.totalorder %s90, %s91
    %p105 = scmp.eq.s32.totalorder %s15, 1
    %p106 = por %p104, %p105
    %p108 = scmp.ne.s32.totalorder %s91, %s107
    %p109 = scmp.eq.s32.totalorder %s15, 0
    %p110 = por %p108, %p109
    %s111 = ssub.s32 %s16, %s28
    %p112 = scmp.eq.s32.totalorder %s111, 0
    %s114 = sadd.s32 %s113, 1
    %s115 = scalar_select %p112, %s113, %s114
    %p118 = pneg %p112
    %p119 = scmp.eq.s32.totalorder %s9, 1
    %p120 = por %p118, %p119
    %p121 = scmp.ne.s32.totalorder %s113, %s116
    %p122 = scmp.eq.s32.totalorder %s9, 0
    %p123 = por %p121, %p122
    %p124 = scmp.ne.s32.totalorder %s113, %s116
    %p125 = scmp.eq.s32.totalorder %s14, 1
    %p126 = por %p124, %p125
    %p127 = scmp.ne.s32.totalorder %s116, %s117
    %p128 = scmp.eq.s32.totalorder %s14, 0
    %p129 = por %p127, %p128
    %p130 = scmp.ne.s32.totalorder %s116, %s117
    %p131 = scmp.eq.s32.totalorder %s15, 1
    %p132 = por %p130, %p131
    %p134 = scmp.ne.s32.totalorder %s117, %s133
    %p135 = scmp.eq.s32.totalorder %s15, 0
    %p136 = por %p134, %p135
    %p137 = scmp.le.s32.totalorder 1, %s9
    %p138 = scmp.lt.s32.totalorder %s9, 3
    %p139 = pnand %p137, %p138
    %p140 = pneg %p139
    // Predicated region
    $region9: #{attention_forward.4} parent=5 // pred_check
      _
    $region10: #{attention_forward.4} parent=5 // pred_check_branch
      %142 = sbr.rel (%p139) target = $region12
    $region11: #{attention_forward.4} parent=5 // pred_region
      %s143 = ssub.s32 %s9, 1
    $region12: #{attention_forward.4} parent=5 // pred_fallthru
      _
    %p144 = scmp.lt.s32.totalorder %s9, 2
    // Predicated region
    $region13: #{attention_forward.4} parent=5 // pred_check
      %p145 = pneg %p144
    $region14: #{attention_forward.4} parent=5 // pred_check_branch
      %147 = sbr.rel (%p145) target = $region16
    $region15: #{attention_forward.4} parent=5 // pred_region
      // Predicated region
      $region17: #{attention_forward.4} parent=15 // pred_check
        %p148 = pneg %p41
      $region18: #{attention_forward.4} parent=15 // pred_check_branch
        %150 = sbr.rel (%p148) target = $region20
      $region19: #{attention_forward.4} parent=15 // pred_region
        %p151 = scmp.lt.s32.totalorder %s16, 1
        %s152 = scalar_select %p151, %s16, 1
        %s153 = smul.addr %s152, 8
        %s154 = scalar_lea.vmem %s0, %s153
      $region20: #{attention_forward.4} parent=15 // pred_fallthru
        _
      // Predicated region
      $region21: #{attention_forward.4} parent=15 // pred_check
        %p155 = pneg %p69
      $region22: #{attention_forward.4} parent=15 // pred_check_branch
        %157 = sbr.rel (%p155) target = $region24
      $region23: #{attention_forward.4} parent=15 // pred_region
        %p158 = scmp.lt.s32.totalorder %s16, 1
        %s159 = scalar_select %p158, %s16, 1
        %p160 = scmp.lt.s32.totalorder %s17, 0
        %s161 = scalar_select %p160, %s17, 0
        %s162 = sadd.s32 %s161, %s159
        %s163 = smul.addr %s162, 8
        %s164 = scalar_lea.vmem %s1, %s163
      $region24: #{attention_forward.4} parent=15 // pred_fallthru
        _
      // Predicated region
      $region25: #{attention_forward.4} parent=15 // pred_check
        %p165 = pneg %p97
      $region26: #{attention_forward.4} parent=15 // pred_check_branch
        %167 = sbr.rel (%p165) target = $region28
      $region27: #{attention_forward.4} parent=15 // pred_region
        %p168 = scmp.lt.s32.totalorder %s16, 1
        %s169 = scalar_select %p168, %s16, 1
        %p170 = scmp.lt.s32.totalorder %s17, 0
        %s171 = scalar_select %p170, %s17, 0
        %s172 = sadd.s32 %s171, %s169
        %s173 = smul.addr %s172, 8
        %s174 = scalar_lea.vmem %s2, %s173
      $region28: #{attention_forward.4} parent=15 // pred_fallthru
        _
    $region16: #{attention_forward.4} parent=5 // pred_fallthru
      _
    %p175 = scmp.le.s32.totalorder 1, %s9
    %p176 = scmp.lt.s32.totalorder %s9, 3
    %p177 = pnand %p175, %p176
    %p178 = pneg %p177
    // Predicated region
    $region29: #{attention_forward.4} parent=5 // pred_check
      _
    $region30: #{attention_forward.4} parent=5 // pred_check_branch
      %180 = sbr.rel (%p177) target = $region32
    $region31: #{attention_forward.4} parent=5 // pred_region
      %s181 = ssub.s32 %s9, 1
      %p182 = scmp.lt.s32.totalorder %s18, 1
      %s183 = scalar_select %p182, %s18, 1
      %s184 = smul.addr %s183, 8
      %s185 = scalar_lea.vmem %s0, %s184
      %p186 = pneg %p47
      %p187 = pneg %p44
      %p188 = scmp.lt.s32.totalorder %s18, 1
      %s189 = scalar_select %p188, %s18, 1
      %p190 = scmp.lt.s32.totalorder %s19, 0
      %s191 = scalar_select %p190, %s19, 0
      %s192 = sadd.s32 %s191, %s189
      %s193 = smul.addr %s192, 8
      %s194 = scalar_lea.vmem %s1, %s193
      %p195 = pneg %p75
      %p196 = pneg %p72
      %p197 = scmp.lt.s32.totalorder %s18, 1
      %s198 = scalar_select %p197, %s18, 1
      %p199 = scmp.lt.s32.totalorder %s19, 0
      %s200 = scalar_select %p199, %s19, 0
      %s201 = sadd.s32 %s200, %s198
      %s202 = smul.addr %s201, 8
      %s203 = scalar_lea.vmem %s2, %s202
      %p204 = pneg %p103
      %p205 = pneg %p100
      %p206 = pneg %p129
      %p207 = pneg %p126
      %p208 = scmp.lt.s32.totalorder %s18, 1
      %s209 = scalar_select %p208, %s18, 1
      %s210 = smul.addr %s209, 8
      %s211 = scalar_lea.vmem %s3, %s210
      %p212 = scmp.lt.s32.totalorder %s18, 1
      %s213 = scalar_select %p212, %s18, 1
      %s214 = smul.addr %s213, 8
      %s215 = scalar_lea.vmem %s0, %s214
      %p216 = scmp.lt.s32.totalorder %s18, 1
      %s217 = scalar_select %p216, %s18, 1
      %p218 = scmp.lt.s32.totalorder %s19, 0
      %s219 = scalar_select %p218, %s19, 0
      %s220 = sadd.s32 %s219, %s217
      %s221 = smul.addr %s220, 8
      %s222 = scalar_lea.vmem %s1, %s221
      %p223 = scmp.lt.s32.totalorder %s18, 1
      %s224 = scalar_select %p223, %s18, 1
      %p225 = scmp.lt.s32.totalorder %s19, 0
      %s226 = scalar_select %p225, %s19, 0
      %s227 = sadd.s32 %s226, %s224
      %s228 = smul.addr %s227, 8
      %s229 = scalar_lea.vmem %s2, %s228
      %p230 = scmp.lt.s32.totalorder %s18, 1
      %s231 = scalar_select %p230, %s18, 1
      %s232 = smul.addr %s231, 8
      %s233 = scalar_lea.vmem %s3, %s232
      %p234 = scmp.eq.s32.totalorder %s19, 0
      // Predicated region
      $region33: #{attention_forward.4} parent=31 // pred_check
        %p235 = pneg %p234
      $region34: #{attention_forward.4} parent=31 // pred_check_branch
        %237 = sbr.rel (%p235) target = $region36
      $region35: #{attention_forward.4} parent=31 // pred_region
        %vm238 = vcmask 7168
        %239 = vst.msk [vmem:[#allocation2] sm:$0xff] %vm238, -inf
        %240 = vst.msk [vmem:[#allocation2 + $0x8] sm:$0xff] %vm238, -inf
        %241 = vst.msk [vmem:[#allocation2 + $0x10] sm:$0xff] %vm238, -inf
        %242 = vst.msk [vmem:[#allocation2 + $0x18] sm:$0xff] %vm238, -inf
        %243 = vst.msk [vmem:[#allocation3] sm:$0xff] %vm238, 0.0
        %244 = vst.msk [vmem:[#allocation3 + $0x8] sm:$0xff] %vm238, 0.0
        %245 = vst.msk [vmem:[#allocation3 + $0x10] sm:$0xff] %vm238, 0.0
        %246 = vst.msk [vmem:[#allocation3 + $0x18] sm:$0xff] %vm238, 0.0
        %vm247 = vcmask 64512
        %248 = vst.msk [vmem:[#allocation4] sm:$0xff] %vm247, 0.0
        %249 = vst.msk [vmem:[#allocation4 + $0x8] sm:$0xff] %vm247, 0.0
        %250 = vst.msk [vmem:[#allocation4 + $0x10] sm:$0xff] %vm247, 0.0
        %251 = vst.msk [vmem:[#allocation4 + $0x18] sm:$0xff] %vm247, 0.0
      $region36: #{attention_forward.4} parent=31 // pred_fallthru
        _
      %v252 = vld [vmem:[%s215] sm:$0xff]
      %v253 = vld [vmem:[%s222] sm:$0xff]
      %v254 = vld [vmem:[%s229] sm:$0xff]
      %v255 = vmul.f32 %v252, 0.35355338
      %vm256 = vcmask 64512
      %v258 = vsel %vm256, %v255, 0
      %v261 = vsel %vm256, %v253, 0
      %263 = vmatprep.subr.mxu0 0.0
      %264 = vmatpush1.xpose.msra.mxu0 %v261
      %265 = vmatprep.subr.mxu0 0.0
      %266 = vmatpush1.xpose.msra.mxu0 0.0
      %267 = vmatprep.subr.mxu0 0.0
      %268 = vmatpush1.xpose.msra.mxu0 0.0
      %269 = vmatprep.subr.mxu0 0.0
      %270 = vmatpush1.xpose.msra.mxu0 0.0
      %271 = vmatprep.subr.mxu0 0.0
      %272 = vmatpush1.xpose.msra.mxu0 0.0
      %273 = vmatprep.subr.mxu0 0.0
      %274 = vmatpush1.xpose.msra.mxu0 0.0
      %275 = vmatprep.subr.mxu0 0.0
      %276 = vmatpush1.xpose.msra.mxu0 0.0
      %277 = vmatprep.subr.mxu0 0.0
      %278 = vmatpush1.xpose.msra.mxu0 0.0
      %279 = vmatprep.subr.mxu0 0.0
      %280 = vmatpush1.xpose.msra.mxu0 0.0
      %281 = vmatprep.subr.mxu0 0.0
      %282 = vmatpush1.xpose.msra.mxu0 0.0
      %283 = vmatprep.subr.mxu0 0.0
      %284 = vmatpush1.xpose.msra.mxu0 0.0
      %285 = vmatprep.subr.mxu0 0.0
      %286 = vmatpush1.xpose.msra.mxu0 0.0
      %287 = vmatprep.subr.mxu0 0.0
      %288 = vmatpush1.xpose.msra.mxu0 0.0
      %289 = vmatprep.subr.mxu0 0.0
      %290 = vmatpush1.xpose.msra.mxu0 0.0
      %291 = vmatprep.subr.mxu0 0.0
      %292 = vmatpush1.xpose.msra.mxu0 0.0
      %293 = vmatprep.subr.mxu0 0.0
      %294 = vmatpush1.xpose.msra.mxu0 0.0
      %295 = vmatprep.subr.mxu0 0.0
      %296 = vmatpush1.xpose.msra.mxu0 0.0
      %297 = vmatprep.subr.mxu0 0.0
      %298 = vmatpush1.xpose.msra.mxu0 0.0
      %299 = vmatprep.subr.mxu0 0.0
      %300 = vmatpush1.xpose.msra.mxu0 0.0
      %301 = vmatprep.subr.mxu0 0.0
      %302 = vmatpush1.xpose.msra.mxu0 0.0
      %303 = vmatprep.subr.mxu0 0.0
      %304 = vmatpush1.xpose.msra.mxu0 0.0
      %305 = vmatprep.subr.mxu0 0.0
      %306 = vmatpush1.xpose.msra.mxu0 0.0
      %307 = vmatprep.subr.mxu0 0.0
      %308 = vmatpush1.xpose.msra.mxu0 0.0
      %309 = vmatprep.subr.mxu0 0.0
      %310 = vmatpush1.xpose.msra.mxu0 0.0
      %311 = vmatprep.subr.mxu0 0.0
      %312 = vmatpush1.xpose.msra.mxu0 0.0
      %313 = vmatprep.subr.mxu0 0.0
      %314 = vmatpush1.xpose.msra.mxu0 0.0
      %315 = vmatprep.subr.mxu0 0.0
      %316 = vmatpush1.xpose.msra.mxu0 0.0
      %317 = vmatprep.subr.mxu0 0.0
      %318 = vmatpush1.xpose.msra.mxu0 0.0
      %319 = vmatprep.subr.mxu0 0.0
      %320 = vmatpush1.xpose.msra.mxu0 0.0
      %321 = vmatprep.subr.mxu0 0.0
      %322 = vmatpush1.xpose.msra.mxu0 0.0
      %323 = vmatprep.subr.mxu0 0.0
      %324 = vmatpush1.xpose.msra.mxu0 0.0
      %325 = vmatprep.subr.mxu0 0.0
      %326 = vmatpush1.xpose.msra.mxu0 0.0
      %327 = vmatprep.mubr.f32.mxu0 0.0
      %328 = vmatmul.mubr.f32.gmra.mrb[0].mxu0 %v258
      %v329 = vpop.f32.mrb[0].mxu0
      %v330 = vadd.f32 0.0, %v329
      %v331 = vpop.f32.mrb[0].mxu0
      %332 = vdwg.mxu0
      %v333 = vld [vmem:[#allocation2] sm:$0xff]
      %v334 = vsel %vm256, %v330, -inf
      %335 = vmax.xlane.f32.xlu0 %v334
      %v336 = vpop.xlane.xlu0 %335
      %v337 = vmax.f32 %v333, %v336
      %v338 = vsub.f32 %v333, %v337
      %v339 = vmul.f32 %v338, 1.442695
      %v340 = vpow.pop %v339
      %342 = vset.pattern.permute.xlu0 0
      %343 = vperm.xlu0 %342, %v337
      %v344 = vpop.permute.xlu0 %343
      %v346 = vsub.f32 %v330, %v344
      %v347 = vmul.f32 %v346, 1.442695
      %v348 = vpow.pop %v347
      %v349 = vld [vmem:[#allocation3] sm:$0xff]
      %v350 = vmul.f32 %v340, %v349
      %v351 = vsel %vm256, %v348, 0.0
      %352 = vadd.xlane.f32.xlu0 %v351
      %v353 = vpop.xlane.xlu0 %352
      %v354 = vadd.f32 %v350, %v353
      %vm355 = vcmask 7168
      %356 = vst.msk [vmem:[#allocation3] sm:$0xff] %vm355, %v354
      %v357 = vld [vmem:[#allocation4] sm:$0xff]
      %359 = vset.pattern.permute.xlu0 0
      %360 = vperm.xlu0 %359, %v340
      %v361 = vpop.permute.xlu0 %360
      %v363 = vmul.f32 %v361, %v357
      %v365 = vsel %vm256, %v348, 0
      %367 = vmatprep.subr.mxu0 0.0
      %368 = vmatpush1.msra.mxu0 %v254
      %369 = vmatprep.subr.mxu0 0.0
      %370 = vmatpush1.msra.mxu0 0.0
      %371 = vmatprep.subr.mxu0 0.0
      %372 = vmatpush1.msra.mxu0 0.0
      %373 = vmatprep.subr.mxu0 0.0
      %374 = vmatpush1.msra.mxu0 0.0
      %375 = vmatprep.subr.mxu0 0.0
      %376 = vmatpush1.msra.mxu0 0.0
      %377 = vmatprep.subr.mxu0 0.0
      %378 = vmatpush1.msra.mxu0 0.0
      %379 = vmatprep.subr.mxu0 0.0
      %380 = vmatpush1.msra.mxu0 0.0
      %381 = vmatprep.subr.mxu0 0.0
      %382 = vmatpush1.msra.mxu0 0.0
      %383 = vmatprep.subr.mxu0 0.0
      %384 = vmatpush1.msra.mxu0 0.0
      %385 = vmatprep.subr.mxu0 0.0
      %386 = vmatpush1.msra.mxu0 0.0
      %387 = vmatprep.subr.mxu0 0.0
      %388 = vmatpush1.msra.mxu0 0.0
      %389 = vmatprep.subr.mxu0 0.0
      %390 = vmatpush1.msra.mxu0 0.0
      %391 = vmatprep.subr.mxu0 0.0
      %392 = vmatpush1.msra.mxu0 0.0
      %393 = vmatprep.subr.mxu0 0.0
      %394 = vmatpush1.msra.mxu0 0.0
      %395 = vmatprep.subr.mxu0 0.0
      %396 = vmatpush1.msra.mxu0 0.0
      %397 = vmatprep.subr.mxu0 0.0
      %398 = vmatpush1.msra.mxu0 0.0
      %399 = vmatprep.subr.mxu0 0.0
      %400 = vmatpush1.msra.mxu0 0.0
      %401 = vmatprep.subr.mxu0 0.0
      %402 = vmatpush1.msra.mxu0 0.0
      %403 = vmatprep.subr.mxu0 0.0
      %404 = vmatpush1.msra.mxu0 0.0
      %405 = vmatprep.subr.mxu0 0.0
      %406 = vmatpush1.msra.mxu0 0.0
      %407 = vmatprep.subr.mxu0 0.0
      %408 = vmatpush1.msra.mxu0 0.0
      %409 = vmatprep.subr.mxu0 0.0
      %410 = vmatpush1.msra.mxu0 0.0
      %411 = vmatprep.subr.mxu0 0.0
      %412 = vmatpush1.msra.mxu0 0.0
      %413 = vmatprep.subr.mxu0 0.0
      %414 = vmatpush1.msra.mxu0 0.0
      %415 = vmatprep.subr.mxu0 0.0
      %416 = vmatpush1.msra.mxu0 0.0
      %417 = vmatprep.subr.mxu0 0.0
      %418 = vmatpush1.msra.mxu0 0.0
      %419 = vmatprep.subr.mxu0 0.0
      %420 = vmatpush1.msra.mxu0 0.0
      %421 = vmatprep.subr.mxu0 0.0
      %422 = vmatpush1.msra.mxu0 0.0
      %423 = vmatprep.subr.mxu0 0.0
      %424 = vmatpush1.msra.mxu0 0.0
      %425 = vmatprep.subr.mxu0 0.0
      %426 = vmatpush1.msra.mxu0 0.0
      %427 = vmatprep.subr.mxu0 0.0
      %428 = vmatpush1.msra.mxu0 0.0
      %429 = vmatprep.subr.mxu0 0.0
      %430 = vmatpush1.msra.mxu0 0.0
      %431 = vmatprep.mubr.f32.mxu0 0.0
      %432 = vmatmul.mubr.f32.gmra.mrb[0].mxu0 %v365
      %v433 = vpop.f32.mrb[0].mxu0
      %v434 = vadd.f32 0.0, %v433
      %v435 = vpop.f32.mrb[0].mxu0
      %436 = vdwg.mxu0
      %v437 = vadd.f32 %v363, %v434
      %438 = vst.msk [vmem:[#allocation4] sm:$0xff] %vm256, %v437
      %439 = vst.msk [vmem:[#allocation2] sm:$0xff] %vm355, %v337
      %440 = vrot.lane.b32.xlu0 %v255, 120
      %v441 = vpop.permute.xlu0 %440
      %442 = vrot.lane.b32.xlu0 %v253, 120
      %v443 = vpop.permute.xlu0 %442
      %v444 = vsel %vm256, %v441, 0
      %v446 = vsel %vm256, %v443, 0
      %448 = vmatprep.subr.mxu0 0.0
      %449 = vmatpush1.xpose.msra.mxu0 %v446
      %450 = vmatprep.subr.mxu0 0.0
      %451 = vmatpush1.xpose.msra.mxu0 0.0
      %452 = vmatprep.subr.mxu0 0.0
      %453 = vmatpush1.xpose.msra.mxu0 0.0
      %454 = vmatprep.subr.mxu0 0.0
      %455 = vmatpush1.xpose.msra.mxu0 0.0
      %456 = vmatprep.subr.mxu0 0.0
      %457 = vmatpush1.xpose.msra.mxu0 0.0
      %458 = vmatprep.subr.mxu0 0.0
      %459 = vmatpush1.xpose.msra.mxu0 0.0
      %460 = vmatprep.subr.mxu0 0.0
      %461 = vmatpush1.xpose.msra.mxu0 0.0
      %462 = vmatprep.subr.mxu0 0.0
      %463 = vmatpush1.xpose.msra.mxu0 0.0
      %464 = vmatprep.subr.mxu0 0.0
      %465 = vmatpush1.xpose.msra.mxu0 0.0
      %466 = vmatprep.subr.mxu0 0.0
      %467 = vmatpush1.xpose.msra.mxu0 0.0
      %468 = vmatprep.subr.mxu0 0.0
      %469 = vmatpush1.xpose.msra.mxu0 0.0
      %470 = vmatprep.subr.mxu0 0.0
      %471 = vmatpush1.xpose.msra.mxu0 0.0
      %472 = vmatprep.subr.mxu0 0.0
      %473 = vmatpush1.xpose.msra.mxu0 0.0
      %474 = vmatprep.subr.mxu0 0.0
      %475 = vmatpush1.xpose.msra.mxu0 0.0
      %476 = vmatprep.subr.mxu0 0.0
      %477 = vmatpush1.xpose.msra.mxu0 0.0
      %478 = vmatprep.subr.mxu0 0.0
      %479 = vmatpush1.xpose.msra.mxu0 0.0
      %480 = vmatprep.subr.mxu0 0.0
      %481 = vmatpush1.xpose.msra.mxu0 0.0
      %482 = vmatprep.subr.mxu0 0.0
      %483 = vmatpush1.xpose.msra.mxu0 0.0
      %484 = vmatprep.subr.mxu0 0.0
      %485 = vmatpush1.xpose.msra.mxu0 0.0
      %486 = vmatprep.subr.mxu0 0.0
      %487 = vmatpush1.xpose.msra.mxu0 0.0
      %488 = vmatprep.subr.mxu0 0.0
      %489 = vmatpush1.xpose.msra.mxu0 0.0
      %490 = vmatprep.subr.mxu0 0.0
      %491 = vmatpush1.xpose.msra.mxu0 0.0
      %492 = vmatprep.subr.mxu0 0.0
      %493 = vmatpush1.xpose.msra.mxu0 0.0
      %494 = vmatprep.subr.mxu0 0.0
      %495 = vmatpush1.xpose.msra.mxu0 0.0
      %496 = vmatprep.subr.mxu0 0.0
      %497 = vmatpush1.xpose.msra.mxu0 0.0
      %498 = vmatprep.subr.mxu0 0.0
      %499 = vmatpush1.xpose.msra.mxu0 0.0
      %500 = vmatprep.subr.mxu0 0.0
      %501 = vmatpush1.xpose.msra.mxu0 0.0
      %502 = vmatprep.subr.mxu0 0.0
      %503 = vmatpush1.xpose.msra.mxu0 0.0
      %504 = vmatprep.subr.mxu0 0.0
      %505 = vmatpush1.xpose.msra.mxu0 0.0
      %506 = vmatprep.subr.mxu0 0.0
      %507 = vmatpush1.xpose.msra.mxu0 0.0
      %508 = vmatprep.subr.mxu0 0.0
      %509 = vmatpush1.xpose.msra.mxu0 0.0
      %510 = vmatprep.subr.mxu0 0.0
      %511 = vmatpush1.xpose.msra.mxu0 0.0
      %512 = vmatprep.mubr.f32.mxu0 0.0
      %513 = vmatmul.mubr.f32.gmra.mrb[0].mxu0 %v444
      %v514 = vpop.f32.mrb[0].mxu0
      %v515 = vadd.f32 0.0, %v514
      %v516 = vpop.f32.mrb[0].mxu0
      %517 = vdwg.mxu0
      %s518 = scalar_lea.vmem [#allocation2], 8
      %v519 = vld [vmem:[%s518] sm:$0xff]
      %v520 = vsel %vm256, %v515, -inf
      %521 = vmax.xlane.f32.xlu0 %v520
      %v522 = vpop.xlane.xlu0 %521
      %v523 = vmax.f32 %v519, %v522
      %v524 = vsub.f32 %v519, %v523
      %v525 = vmul.f32 %v524, 1.442695
      %v526 = vpow.pop %v525
      %528 = vset.pattern.permute.xlu0 0
      %529 = vperm.xlu0 %528, %v523
      %v530 = vpop.permute.xlu0 %529
      %v532 = vsub.f32 %v515, %v530
      %v533 = vmul.f32 %v532, 1.442695
      %v534 = vpow.pop %v533
      %s535 = scalar_lea.vmem [#allocation3], 8
      %v536 = vld [vmem:[%s535] sm:$0xff]
      %v537 = vmul.f32 %v526, %v536
      %v538 = vsel %vm256, %v534, 0.0
      %539 = vadd.xlane.f32.xlu0 %v538
      %v540 = vpop.xlane.xlu0 %539
      %v541 = vadd.f32 %v537, %v540
      %542 = vst.msk [vmem:[%s535] sm:$0xff] %vm355, %v541
      %s543 = scalar_lea.vmem [#allocation4], 8
      %v544 = vld [vmem:[%s543] sm:$0xff]
      %546 = vset.pattern.permute.xlu0 0
      %547 = vperm.xlu0 %546, %v526
      %v548 = vpop.permute.xlu0 %547
      %v550 = vmul.f32 %v548, %v544
      %552 = vrot.lane.b32.xlu0 %v254, 120
      %v553 = vpop.permute.xlu0 %552
      %v556 = vsel %vm256, %v534, 0
      %558 = vmatprep.subr.mxu0 0.0
      %559 = vmatpush1.msra.mxu0 %v553
      %560 = vmatprep.subr.mxu0 0.0
      %561 = vmatpush1.msra.mxu0 0.0
      %562 = vmatprep.subr.mxu0 0.0
      %563 = vmatpush1.msra.mxu0 0.0
      %564 = vmatprep.subr.mxu0 0.0
      %565 = vmatpush1.msra.mxu0 0.0
      %566 = vmatprep.subr.mxu0 0.0
      %567 = vmatpush1.msra.mxu0 0.0
      %568 = vmatprep.subr.mxu0 0.0
      %569 = vmatpush1.msra.mxu0 0.0
      %570 = vmatprep.subr.mxu0 0.0
      %571 = vmatpush1.msra.mxu0 0.0
      %572 = vmatprep.subr.mxu0 0.0
      %573 = vmatpush1.msra.mxu0 0.0
      %574 = vmatprep.subr.mxu0 0.0
      %575 = vmatpush1.msra.mxu0 0.0
      %576 = vmatprep.subr.mxu0 0.0
      %577 = vmatpush1.msra.mxu0 0.0
      %578 = vmatprep.subr.mxu0 0.0
      %579 = vmatpush1.msra.mxu0 0.0
      %580 = vmatprep.subr.mxu0 0.0
      %581 = vmatpush1.msra.mxu0 0.0
      %582 = vmatprep.subr.mxu0 0.0
      %583 = vmatpush1.msra.mxu0 0.0
      %584 = vmatprep.subr.mxu0 0.0
      %585 = vmatpush1.msra.mxu0 0.0
      %586 = vmatprep.subr.mxu0 0.0
      %587 = vmatpush1.msra.mxu0 0.0
      %588 = vmatprep.subr.mxu0 0.0
      %589 = vmatpush1.msra.mxu0 0.0
      %590 = vmatprep.subr.mxu0 0.0
      %591 = vmatpush1.msra.mxu0 0.0
      %592 = vmatprep.subr.mxu0 0.0
      %593 = vmatpush1.msra.mxu0 0.0
      %594 = vmatprep.subr.mxu0 0.0
      %595 = vmatpush1.msra.mxu0 0.0
      %596 = vmatprep.subr.mxu0 0.0
      %597 = vmatpush1.msra.mxu0 0.0
      %598 = vmatprep.subr.mxu0 0.0
      %599 = vmatpush1.msra.mxu0 0.0
      %600 = vmatprep.subr.mxu0 0.0
      %601 = vmatpush1.msra.mxu0 0.0
      %602 = vmatprep.subr.mxu0 0.0
      %603 = vmatpush1.msra.mxu0 0.0
      %604 = vmatprep.subr.mxu0 0.0
      %605 = vmatpush1.msra.mxu0 0.0
      %606 = vmatprep.subr.mxu0 0.0
      %607 = vmatpush1.msra.mxu0 0.0
      %608 = vmatprep.subr.mxu0 0.0
      %609 = vmatpush1.msra.mxu0 0.0
      %610 = vmatprep.subr.mxu0 0.0
      %611 = vmatpush1.msra.mxu0 0.0
      %612 = vmatprep.subr.mxu0 0.0
      %613 = vmatpush1.msra.mxu0 0.0
      %614 = vmatprep.subr.mxu0 0.0
      %615 = vmatpush1.msra.mxu0 0.0
      %616 = vmatprep.subr.mxu0 0.0
      %617 = vmatpush1.msra.mxu0 0.0
      %618 = vmatprep.subr.mxu0 0.0
      %619 = vmatpush1.msra.mxu0 0.0
      %620 = vmatprep.subr.mxu0 0.0
      %621 = vmatpush1.msra.mxu0 0.0
      %622 = vmatprep.mubr.f32.mxu0 0.0
      %623 = vmatmul.mubr.f32.gmra.mrb[0].mxu0 %v556
      %v624 = vpop.f32.mrb[0].mxu0
      %v625 = vadd.f32 0.0, %v624
      %v626 = vpop.f32.mrb[0].mxu0
      %627 = vdwg.mxu0
      %v628 = vadd.f32 %v550, %v625
      %629 = vst.msk [vmem:[%s543] sm:$0xff] %vm256, %v628
      %630 = vst.msk [vmem:[%s518] sm:$0xff] %vm355, %v523
      %631 = vrot.lane.b32.xlu0 %v255, 112
      %v632 = vpop.permute.xlu0 %631
      %633 = vrot.lane.b32.xlu0 %v253, 112
      %v634 = vpop.permute.xlu0 %633
      %v635 = vsel %vm256, %v632, 0
      %v637 = vsel %vm256, %v634, 0
      %639 = vmatprep.subr.mxu0 0.0
      %640 = vmatpush1.xpose.msra.mxu0 %v637
      %641 = vmatprep.subr.mxu0 0.0
      %642 = vmatpush1.xpose.msra.mxu0 0.0
      %643 = vmatprep.subr.mxu0 0.0
      %644 = vmatpush1.xpose.msra.mxu0 0.0
      %645 = vmatprep.subr.mxu0 0.0
      %646 = vmatpush1.xpose.msra.mxu0 0.0
      %647 = vmatprep.subr.mxu0 0.0
      %648 = vmatpush1.xpose.msra.mxu0 0.0
      %649 = vmatprep.subr.mxu0 0.0
      %650 = vmatpush1.xpose.msra.mxu0 0.0
      %651 = vmatprep.subr.mxu0 0.0
      %652 = vmatpush1.xpose.msra.mxu0 0.0
      %653 = vmatprep.subr.mxu0 0.0
      %654 = vmatpush1.xpose.msra.mxu0 0.0
      %655 = vmatprep.subr.mxu0 0.0
      %656 = vmatpush1.xpose.msra.mxu0 0.0
      %657 = vmatprep.subr.mxu0 0.0
      %658 = vmatpush1.xpose.msra.mxu0 0.0
      %659 = vmatprep.subr.mxu0 0.0
      %660 = vmatpush1.xpose.msra.mxu0 0.0
      %661 = vmatprep.subr.mxu0 0.0
      %662 = vmatpush1.xpose.msra.mxu0 0.0
      %663 = vmatprep.subr.mxu0 0.0
      %664 = vmatpush1.xpose.msra.mxu0 0.0
      %665 = vmatprep.subr.mxu0 0.0
      %666 = vmatpush1.xpose.msra.mxu0 0.0
      %667 = vmatprep.subr.mxu0 0.0
      %668 = vmatpush1.xpose.msra.mxu0 0.0
      %669 = vmatprep.subr.mxu0 0.0
      %670 = vmatpush1.xpose.msra.mxu0 0.0
      %671 = vmatprep.subr.mxu0 0.0
      %672 = vmatpush1.xpose.msra.mxu0 0.0
      %673 = vmatprep.subr.mxu0 0.0
      %674 = vmatpush1.xpose.msra.mxu0 0.0
      %675 = vmatprep.subr.mxu0 0.0
      %676 = vmatpush1.xpose.msra.mxu0 0.0
      %677 = vmatprep.subr.mxu0 0.0
      %678 = vmatpush1.xpose.msra.mxu0 0.0
      %679 = vmatprep.subr.mxu0 0.0
      %680 = vmatpush1.xpose.msra.mxu0 0.0
      %681 = vmatprep.subr.mxu0 0.0
      %682 = vmatpush1.xpose.msra.mxu0 0.0
      %683 = vmatprep.subr.mxu0 0.0
      %684 = vmatpush1.xpose.msra.mxu0 0.0
      %685 = vmatprep.subr.mxu0 0.0
      %686 = vmatpush1.xpose.msra.mxu0 0.0
      %687 = vmatprep.subr.mxu0 0.0
      %688 = vmatpush1.xpose.msra.mxu0 0.0
      %689 = vmatprep.subr.mxu0 0.0
      %690 = vmatpush1.xpose.msra.mxu0 0.0
      %691 = vmatprep.subr.mxu0 0.0
      %692 = vmatpush1.xpose.msra.mxu0 0.0
      %693 = vmatprep.subr.mxu0 0.0
      %694 = vmatpush1.xpose.msra.mxu0 0.0
      %695 = vmatprep.subr.mxu0 0.0
      %696 = vmatpush1.xpose.msra.mxu0 0.0
      %697 = vmatprep.subr.mxu0 0.0
      %698 = vmatpush1.xpose.msra.mxu0 0.0
      %699 = vmatprep.subr.mxu0 0.0
      %700 = vmatpush1.xpose.msra.mxu0 0.0
      %701 = vmatprep.subr.mxu0 0.0
      %702 = vmatpush1.xpose.msra.mxu0 0.0
      %703 = vmatprep.mubr.f32.mxu0 0.0
      %704 = vmatmul.mubr.f32.gmra.mrb[0].mxu0 %v635
      %v705 = vpop.f32.mrb[0].mxu0
      %v706 = vadd.f32 0.0, %v705
      %v707 = vpop.f32.mrb[0].mxu0
      %708 = vdwg.mxu0
      %s709 = scalar_lea.vmem [#allocation2], 16
      %v710 = vld [vmem:[%s709] sm:$0xff]
      %v711 = vsel %vm256, %v706, -inf
      %712 = vmax.xlane.f32.xlu0 %v711
      %v713 = vpop.xlane.xlu0 %712
      %v714 = vmax.f32 %v710, %v713
      %v715 = vsub.f32 %v710, %v714
      %v716 = vmul.f32 %v715, 1.442695
      %v717 = vpow.pop %v716
      %719 = vset.pattern.permute.xlu0 0
      %720 = vperm.xlu0 %719, %v714
      %v721 = vpop.permute.xlu0 %720
      %v723 = vsub.f32 %v706, %v721
      %v724 = vmul.f32 %v723, 1.442695
      %v725 = vpow.pop %v724
      %s726 = scalar_lea.vmem [#allocation3], 16
      %v727 = vld [vmem:[%s726] sm:$0xff]
      %v728 = vmul.f32 %v717, %v727
      %v729 = vsel %vm256, %v725, 0.0
      %730 = vadd.xlane.f32.xlu0 %v729
      %v731 = vpop.xlane.xlu0 %730
      %v732 = vadd.f32 %v728, %v731
      %733 = vst.msk [vmem:[%s726] sm:$0xff] %vm355, %v732
      %s734 = scalar_lea.vmem [#allocation4], 16
      %v735 = vld [vmem:[%s734] sm:$0xff]
      %737 = vset.pattern.permute.xlu0 0
      %738 = vperm.xlu0 %737, %v717
      %v739 = vpop.permute.xlu0 %738
      %v741 = vmul.f32 %v739, %v735
      %742 = vrot.lane.b32.xlu0 %v254, 112
      %v743 = vpop.permute.xlu0 %742
      %v746 = vsel %vm256, %v725, 0
      %748 = vmatprep.subr.mxu0 0.0
      %749 = vmatpush1.msra.mxu0 %v743
      %750 = vmatprep.subr.mxu0 0.0
      %751 = vmatpush1.msra.mxu0 0.0
      %752 = vmatprep.subr.mxu0 0.0
      %753 = vmatpush1.msra.mxu0 0.0
      %754 = vmatprep.subr.mxu0 0.0
      %755 = vmatpush1.msra.mxu0 0.0
      %756 = vmatprep.subr.mxu0 0.0
      %757 = vmatpush1.msra.mxu0 0.0
      %758 = vmatprep.subr.mxu0 0.0
      %759 = vmatpush1.msra.mxu0 0.0
      %760 = vmatprep.subr.mxu0 0.0
      %761 = vmatpush1.msra.mxu0 0.0
      %762 = vmatprep.subr.mxu0 0.0
      %763 = vmatpush1.msra.mxu0 0.0
      %764 = vmatprep.subr.mxu0 0.0
      %765 = vmatpush1.msra.mxu0 0.0
      %766 = vmatprep.subr.mxu0 0.0
      %767 = vmatpush1.msra.mxu0 0.0
      %768 = vmatprep.subr.mxu0 0.0
      %769 = vmatpush1.msra.mxu0 0.0
      %770 = vmatprep.subr.mxu0 0.0
      %771 = vmatpush1.msra.mxu0 0.0
      %772 = vmatprep.subr.mxu0 0.0
      %773 = vmatpush1.msra.mxu0 0.0
      %774 = vmatprep.subr.mxu0 0.0
      %775 = vmatpush1.msra.mxu0 0.0
      %776 = vmatprep.subr.mxu0 0.0
      %777 = vmatpush1.msra.mxu0 0.0
      %778 = vmatprep.subr.mxu0 0.0
      %779 = vmatpush1.msra.mxu0 0.0
      %780 = vmatprep.subr.mxu0 0.0
      %781 = vmatpush1.msra.mxu0 0.0
      %782 = vmatprep.subr.mxu0 0.0
      %783 = vmatpush1.msra.mxu0 0.0
      %784 = vmatprep.subr.mxu0 0.0
      %785 = vmatpush1.msra.mxu0 0.0
      %786 = vmatprep.subr.mxu0 0.0
      %787 = vmatpush1.msra.mxu0 0.0
      %788 = vmatprep.subr.mxu0 0.0
      %789 = vmatpush1.msra.mxu0 0.0
      %790 = vmatprep.subr.mxu0 0.0
      %791 = vmatpush1.msra.mxu0 0.0
      %792 = vmatprep.subr.mxu0 0.0
      %793 = vmatpush1.msra.mxu0 0.0
      %794 = vmatprep.subr.mxu0 0.0
      %795 = vmatpush1.msra.mxu0 0.0
      %796 = vmatprep.subr.mxu0 0.0
      %797 = vmatpush1.msra.mxu0 0.0
      %798 = vmatprep.subr.mxu0 0.0
      %799 = vmatpush1.msra.mxu0 0.0
      %800 = vmatprep.subr.mxu0 0.0
      %801 = vmatpush1.msra.mxu0 0.0
      %802 = vmatprep.subr.mxu0 0.0
      %803 = vmatpush1.msra.mxu0 0.0
      %804 = vmatprep.subr.mxu0 0.0
      %805 = vmatpush1.msra.mxu0 0.0
      %806 = vmatprep.subr.mxu0 0.0
      %807 = vmatpush1.msra.mxu0 0.0
      %808 = vmatprep.subr.mxu0 0.0
      %809 = vmatpush1.msra.mxu0 0.0
      %810 = vmatprep.subr.mxu0 0.0
      %811 = vmatpush1.msra.mxu0 0.0
      %812 = vmatprep.mubr.f32.mxu0 0.0
      %813 = vmatmul.mubr.f32.gmra.mrb[0].mxu0 %v746
      %v814 = vpop.f32.mrb[0].mxu0
      %v815 = vadd.f32 0.0, %v814
      %v816 = vpop.f32.mrb[0].mxu0
      %817 = vdwg.mxu0
      %v818 = vadd.f32 %v741, %v815
      %819 = vst.msk [vmem:[%s734] sm:$0xff] %vm256, %v818
      %820 = vst.msk [vmem:[%s709] sm:$0xff] %vm355, %v714
      %821 = vrot.lane.b32.xlu0 %v255, 104
      %v822 = vpop.permute.xlu0 %821
      %823 = vrot.lane.b32.xlu0 %v253, 104
      %v824 = vpop.permute.xlu0 %823
      %v825 = vsel %vm256, %v822, 0
      %v827 = vsel %vm256, %v824, 0
      %829 = vmatprep.subr.mxu0 0.0
      %830 = vmatpush1.xpose.msra.mxu0 %v827
      %831 = vmatprep.subr.mxu0 0.0
      %832 = vmatpush1.xpose.msra.mxu0 0.0
      %833 = vmatprep.subr.mxu0 0.0
      %834 = vmatpush1.xpose.msra.mxu0 0.0
      %835 = vmatprep.subr.mxu0 0.0
      %836 = vmatpush1.xpose.msra.mxu0 0.0
      %837 = vmatprep.subr.mxu0 0.0
      %838 = vmatpush1.xpose.msra.mxu0 0.0
      %839 = vmatprep.subr.mxu0 0.0
      %840 = vmatpush1.xpose.msra.mxu0 0.0
      %841 = vmatprep.subr.mxu0 0.0
      %842 = vmatpush1.xpose.msra.mxu0 0.0
      %843 = vmatprep.subr.mxu0 0.0
      %844 = vmatpush1.xpose.msra.mxu0 0.0
      %845 = vmatprep.subr.mxu0 0.0
      %846 = vmatpush1.xpose.msra.mxu0 0.0
      %847 = vmatprep.subr.mxu0 0.0
      %848 = vmatpush1.xpose.msra.mxu0 0.0
      %849 = vmatprep.subr.mxu0 0.0
      %850 = vmatpush1.xpose.msra.mxu0 0.0
      %851 = vmatprep.subr.mxu0 0.0
      %852 = vmatpush1.xpose.msra.mxu0 0.0
      %853 = vmatprep.subr.mxu0 0.0
      %854 = vmatpush1.xpose.msra.mxu0 0.0
      %855 = vmatprep.subr.mxu0 0.0
      %856 = vmatpush1.xpose.msra.mxu0 0.0
      %857 = vmatprep.subr.mxu0 0.0
      %858 = vmatpush1.xpose.msra.mxu0 0.0
      %859 = vmatprep.subr.mxu0 0.0
      %860 = vmatpush1.xpose.msra.mxu0 0.0
      %861 = vmatprep.subr.mxu0 0.0
      %862 = vmatpush1.xpose.msra.mxu0 0.0
      %863 = vmatprep.subr.mxu0 0.0
      %864 = vmatpush1.xpose.msra.mxu0 0.0
      %865 = vmatprep.subr.mxu0 0.0
      %866 = vmatpush1.xpose.msra.mxu0 0.0
      %867 = vmatprep.subr.mxu0 0.0
      %868 = vmatpush1.xpose.msra.mxu0 0.0
      %869 = vmatprep.subr.mxu0 0.0
      %870 = vmatpush1.xpose.msra.mxu0 0.0
      %871 = vmatprep.subr.mxu0 0.0
      %872 = vmatpush1.xpose.msra.mxu0 0.0
      %873 = vmatprep.subr.mxu0 0.0
      %874 = vmatpush1.xpose.msra.mxu0 0.0
      %875 = vmatprep.subr.mxu0 0.0
      %876 = vmatpush1.xpose.msra.mxu0 0.0
      %877 = vmatprep.subr.mxu0 0.0
      %878 = vmatpush1.xpose.msra.mxu0 0.0
      %879 = vmatprep.subr.mxu0 0.0
      %880 = vmatpush1.xpose.msra.mxu0 0.0
      %881 = vmatprep.subr.mxu0 0.0
      %882 = vmatpush1.xpose.msra.mxu0 0.0
      %883 = vmatprep.subr.mxu0 0.0
      %884 = vmatpush1.xpose.msra.mxu0 0.0
      %885 = vmatprep.subr.mxu0 0.0
      %886 = vmatpush1.xpose.msra.mxu0 0.0
      %887 = vmatprep.subr.mxu0 0.0
      %888 = vmatpush1.xpose.msra.mxu0 0.0
      %889 = vmatprep.subr.mxu0 0.0
      %890 = vmatpush1.xpose.msra.mxu0 0.0
      %891 = vmatprep.subr.mxu0 0.0
      %892 = vmatpush1.xpose.msra.mxu0 0.0
      %893 = vmatprep.mubr.f32.mxu0 0.0
      %894 = vmatmul.mubr.f32.gmra.mrb[0].mxu0 %v825
      %v895 = vpop.f32.mrb[0].mxu0
      %v896 = vadd.f32 0.0, %v895
      %v897 = vpop.f32.mrb[0].mxu0
      %898 = vdwg.mxu0
      %s899 = scalar_lea.vmem [#allocation2], 24
      %v900 = vld [vmem:[%s899] sm:$0xff]
      %v901 = vsel %vm256, %v896, -inf
      %902 = vmax.xlane.f32.xlu0 %v901
      %v903 = vpop.xlane.xlu0 %902
      %v904 = vmax.f32 %v900, %v903
      %v905 = vsub.f32 %v900, %v904
      %v906 = vmul.f32 %v905, 1.442695
      %v907 = vpow.pop %v906
      %909 = vset.pattern.permute.xlu0 0
      %910 = vperm.xlu0 %909, %v904
      %v911 = vpop.permute.xlu0 %910
      %v913 = vsub.f32 %v896, %v911
      %v914 = vmul.f32 %v913, 1.442695
      %v915 = vpow.pop %v914
      %s916 = scalar_lea.vmem [#allocation3], 24
      %v917 = vld [vmem:[%s916] sm:$0xff]
      %v918 = vmul.f32 %v907, %v917
      %v919 = vsel %vm256, %v915, 0.0
      %920 = vadd.xlane.f32.xlu0 %v919
      %v921 = vpop.xlane.xlu0 %920
      %v922 = vadd.f32 %v918, %v921
      %923 = vst.msk [vmem:[%s916] sm:$0xff] %vm355, %v922
      %s924 = scalar_lea.vmem [#allocation4], 24
      %v925 = vld [vmem:[%s924] sm:$0xff]
      %927 = vset.pattern.permute.xlu0 0
      %928 = vperm.xlu0 %927, %v907
      %v929 = vpop.permute.xlu0 %928
      %v931 = vmul.f32 %v929, %v925
      %932 = vrot.lane.b32.xlu0 %v254, 104
      %v933 = vpop.permute.xlu0 %932
      %v936 = vsel %vm256, %v915, 0
      %938 = vmatprep.subr.mxu0 0.0
      %939 = vmatpush1.msra.mxu0 %v933
      %940 = vmatprep.subr.mxu0 0.0
      %941 = vmatpush1.msra.mxu0 0.0
      %942 = vmatprep.subr.mxu0 0.0
      %943 = vmatpush1.msra.mxu0 0.0
      %944 = vmatprep.subr.mxu0 0.0
      %945 = vmatpush1.msra.mxu0 0.0
      %946 = vmatprep.subr.mxu0 0.0
      %947 = vmatpush1.msra.mxu0 0.0
      %948 = vmatprep.subr.mxu0 0.0
      %949 = vmatpush1.msra.mxu0 0.0
      %950 = vmatprep.subr.mxu0 0.0
      %951 = vmatpush1.msra.mxu0 0.0
      %952 = vmatprep.subr.mxu0 0.0
      %953 = vmatpush1.msra.mxu0 0.0
      %954 = vmatprep.subr.mxu0 0.0
      %955 = vmatpush1.msra.mxu0 0.0
      %956 = vmatprep.subr.mxu0 0.0
      %957 = vmatpush1.msra.mxu0 0.0
      %958 = vmatprep.subr.mxu0 0.0
      %959 = vmatpush1.msra.mxu0 0.0
      %960 = vmatprep.subr.mxu0 0.0
      %961 = vmatpush1.msra.mxu0 0.0
      %962 = vmatprep.subr.mxu0 0.0
      %963 = vmatpush1.msra.mxu0 0.0
      %964 = vmatprep.subr.mxu0 0.0
      %965 = vmatpush1.msra.mxu0 0.0
      %966 = vmatprep.subr.mxu0 0.0
      %967 = vmatpush1.msra.mxu0 0.0
      %968 = vmatprep.subr.mxu0 0.0
      %969 = vmatpush1.msra.mxu0 0.0
      %970 = vmatprep.subr.mxu0 0.0
      %971 = vmatpush1.msra.mxu0 0.0
      %972 = vmatprep.subr.mxu0 0.0
      %973 = vmatpush1.msra.mxu0 0.0
      %974 = vmatprep.subr.mxu0 0.0
      %975 = vmatpush1.msra.mxu0 0.0
      %976 = vmatprep.subr.mxu0 0.0
      %977 = vmatpush1.msra.mxu0 0.0
      %978 = vmatprep.subr.mxu0 0.0
      %979 = vmatpush1.msra.mxu0 0.0
      %980 = vmatprep.subr.mxu0 0.0
      %981 = vmatpush1.msra.mxu0 0.0
      %982 = vmatprep.subr.mxu0 0.0
      %983 = vmatpush1.msra.mxu0 0.0
      %984 = vmatprep.subr.mxu0 0.0
      %985 = vmatpush1.msra.mxu0 0.0
      %986 = vmatprep.subr.mxu0 0.0
      %987 = vmatpush1.msra.mxu0 0.0
      %988 = vmatprep.subr.mxu0 0.0
      %989 = vmatpush1.msra.mxu0 0.0
      %990 = vmatprep.subr.mxu0 0.0
      %991 = vmatpush1.msra.mxu0 0.0
      %992 = vmatprep.subr.mxu0 0.0
      %993 = vmatpush1.msra.mxu0 0.0
      %994 = vmatprep.subr.mxu0 0.0
      %995 = vmatpush1.msra.mxu0 0.0
      %996 = vmatprep.subr.mxu0 0.0
      %997 = vmatpush1.msra.mxu0 0.0
      %998 = vmatprep.subr.mxu0 0.0
      %999 = vmatpush1.msra.mxu0 0.0
      %1000 = vmatprep.subr.mxu0 0.0
      %1001 = vmatpush1.msra.mxu0 0.0
      %1002 = vmatprep.mubr.f32.mxu0 0.0
      %1003 = vmatmul.mubr.f32.gmra.mrb[0].mxu0 %v936
      %v1004 = vpop.f32.mrb[0].mxu0
      %v1005 = vadd.f32 0.0, %v1004
      %v1006 = vpop.f32.mrb[0].mxu0
      %1007 = vdwg.mxu0
      %v1008 = vadd.f32 %v931, %v1005
      %1009 = vst.msk [vmem:[%s924] sm:$0xff] %vm256, %v1008
      %1010 = vst.msk [vmem:[%s899] sm:$0xff] %vm355, %v904
      // Predicated region
      $region37: #{attention_forward.4} parent=31 // pred_check
        %p1011 = pneg %p234
      $region38: #{attention_forward.4} parent=31 // pred_check_branch
        %1013 = sbr.rel (%p1011) target = $region40
      $region39: #{attention_forward.4} parent=31 // pred_region
        %v1014 = vld [vmem:[#allocation4] sm:$0xff]
        %v1015 = vld [vmem:[#allocation3] sm:$0xff]
        %v1016 = vrcp.pop %v1015
        %1018 = vset.pattern.permute.xlu0 0
        %1019 = vperm.xlu0 %1018, %v1016
        %v1020 = vpop.permute.xlu0 %1019
        %v1022 = vmul.f32 %v1014, %v1020
        %v1023 = vld [vmem:[%s543] sm:$0xff]
        %v1024 = vld [vmem:[%s535] sm:$0xff]
        %v1025 = vrcp.pop %v1024
        %1027 = vset.pattern.permute.xlu0 0
        %1028 = vperm.xlu0 %1027, %v1025
        %v1029 = vpop.permute.xlu0 %1028
        %v1031 = vmul.f32 %v1023, %v1029
        %v1032 = vld [vmem:[%s734] sm:$0xff]
        %v1033 = vld [vmem:[%s726] sm:$0xff]
        %v1034 = vrcp.pop %v1033
        %1036 = vset.pattern.permute.xlu0 0
        %1037 = vperm.xlu0 %1036, %v1034
        %v1038 = vpop.permute.xlu0 %1037
        %v1040 = vmul.f32 %v1032, %v1038
        %v1041 = vld [vmem:[%s924] sm:$0xff]
        %v1042 = vld [vmem:[%s916] sm:$0xff]
        %v1043 = vrcp.pop %v1042
        %1045 = vset.pattern.permute.xlu0 0
        %1046 = vperm.xlu0 %1045, %v1043
        %v1047 = vpop.permute.xlu0 %1046
        %v1049 = vmul.f32 %v1041, %v1047
        %1051 = vrot.lane.b32.xlu0 %v1031, 8
        %v1052 = vpop.permute.xlu0 %1051
        %1055 = vrot.lane.b32.xlu0 %v1040, 16
        %v1056 = vpop.permute.xlu0 %1055
        %1059 = vrot.lane.b32.xlu0 %v1049, 24
        %v1060 = vpop.permute.xlu0 %1059
        %v1062 = vsel %vm256, %v1022, %v1052
        %vm1063 = vcmask 130048
        %v1064 = vsel %vm1063, %v1062, %v1056
        %vm1065 = vcmask 195584
        %v1066 = vsel %vm1065, %v1064, %v1060
        %vm1067 = vcmask 261120
        %1068 = vst.msk [vmem:[%s233] sm:$0xff] %vm1067, %v1066
      $region40: #{attention_forward.4} parent=31 // pred_fallthru
        _
      %p1069 = scmp.lt.s32.totalorder %s18, 1
      %s1070 = scalar_select %p1069, %s18, 1
      %s1071 = smul.addr %s1070, 8
      %s1072 = scalar_lea.vmem %s3, %s1071
      // Predicated region
      $region41: #{attention_forward.4} parent=31 // pred_check
        %p1073 = pneg %p126
      $region42: #{attention_forward.4} parent=31 // pred_check_branch
        %1075 = sbr.rel (%p1073) target = $region44
      $region43: #{attention_forward.4} parent=31 // pred_region
        _
      $region44: #{attention_forward.4} parent=31 // pred_fallthru
        _
    $region32: #{attention_forward.4} parent=5 // pred_fallthru
      _
    %p1076 = scmp.le.s32.totalorder 2, %s9
    // Predicated region
    $region45: #{attention_forward.4} parent=5 // pred_check
      %p1077 = pneg %p1076
    $region46: #{attention_forward.4} parent=5 // pred_check_branch
      %1079 = sbr.rel (%p1077) target = $region48
    $region47: #{attention_forward.4} parent=5 // pred_region
      %s1080 = ssub.s32 %s9, 2
      // Predicated region
      $region49: #{attention_forward.4} parent=47 // pred_check
        %p1081 = pneg %p132
      $region50: #{attention_forward.4} parent=47 // pred_check_branch
        %1083 = sbr.rel (%p1081) target = $region52
      $region51: #{attention_forward.4} parent=47 // pred_region
        %p1084 = scmp.lt.s32.totalorder %s20, 1
        %s1085 = scalar_select %p1084, %s20, 1
        %s1086 = smul.addr %s1085, 8
        %s1087 = scalar_lea.vmem %s3, %s1086
      $region52: #{attention_forward.4} parent=47 // pred_fallthru
        _
    $region48: #{attention_forward.4} parent=5 // pred_fallthru
      _
  $region6: #{attention_forward.4} parent=0 // loop_footer
    %s13 = sadd.s32 1, %s9
  $region7: #{attention_forward.4} parent=0 // loop_footer_branch
    %8 = sbr.rel target = $region3
  $region8: #{attention_forward.4} parent=0 // loop_exit
    _

</llo_original>
